<compile_context>
chip_gen: v7x
topology: tpu7x:2x2x1
jax: 0.10.0
libtpu: 0.0.40
codegen_flags: <defaults>
</compile_context>

<pallas_src>
import jax
import jax.numpy as jnp
from jax import lax
from jax.experimental import pallas as pl
from jax.experimental.pallas import tpu as pltpu


# --------------------------------------------------------------------------
# strip-height selection helpers
# --------------------------------------------------------------------------
def _largest_divisor_leq(n, cap):
    cap = int(max(1, min(cap, n)))
    for d in range(cap, 0, -1):
        if n % d == 0:
            return d
    return 1


def _choose_strip_height(n_rows, per_row_bytes, budget_bytes=4 << 20, row_cap=32):
    """Largest divisor of n_rows whose per-strip footprint stays under budget.

    The 4 MiB default keeps (double-buffered input strip + output strip +
    f32 scratch) comfortably under the default scoped-VMEM limit on every
    generation (v5e: 16 MiB, v6e: 32 MiB, v7x: 32 of 64 MiB physical).
    Raise the budget per generation if profiling shows the DMA pipeline
    is starved by too-small strips.
    """
    cap = max(1, min(row_cap, budget_bytes // max(int(per_row_bytes), 1)))
    return _largest_divisor_leq(n_rows, cap)


# --------------------------------------------------------------------------
# Kernel 1: fused zero-pad + 3x3 stride-2 conv on a parity-packed row strip.
#   xb_ref : (1, th, 2, Wo+1, 2C)   body pair-rows   [hp = i*th .. i*th+th)
#   xh_ref : (1, 1,  2, Wo+1, 2C)   halo pair-row    [hp = (i+1)*th]
#   w_ref  : (9, C, Co)             tap-major weights (dy*3+dx, c, co)
#   b_ref  : (1, Co)                bias (f32)
#   o_ref  : (1, th, Wo, Co)
#   acc_ref: (th*Wo, Co) f32 VMEM scratch accumulator
# Parity packing: packed[n, hp, a, wp, b*C + c] = x_pad[n, 2*hp + a, 2*wp + b, c]
# so tap (dy, dx) for output (ho, wo) is a contiguous static slice.
# --------------------------------------------------------------------------
def _conv3x3_s2_kernel(xb_ref, xh_ref, w_ref, b_ref, o_ref, acc_ref):
    _, th, Wo, Co = o_ref.shape
    C = xb_ref.shape[-1] // 2

    xb = xb_ref[0]                                        # (th, 2, Wo+1, 2C)
    xh = xh_ref[0]                                        # (1,  2, Wo+1, 2C)
    # even padded rows for this strip (th body rows + 1 halo row below)
    E = jnp.concatenate([xb[:, 0], xh[:, 0]], axis=0)     # (th+1, Wo+1, 2C)
    O = xb[:, 1]                                          # (th,   Wo+1, 2C)

    first = True
    for dy in range(3):
        if dy == 0:
            rows = E[0:th]            # even padded row 2*ho
        elif dy == 1:
            rows = O                  # odd  padded row 2*ho + 1
        else:
            rows = E[1:th + 1]        # even padded row 2*ho + 2
        for dx in range(3):
            lane0 = C if dx == 1 else 0      # odd columns live in lanes [C:2C)
            col0 = 1 if dx == 2 else 0       # dx=2 -> next even column
            patch = rows[:, col0:col0 + Wo, lane0:lane0 + C]      # (th, Wo, C)
            p2 = patch.reshape(th * Wo, C).astype(w_ref.dtype)
            contrib = jnp.dot(p2, w_ref[dy * 3 + dx],
                              preferred_element_type=jnp.float32)
            if first:
                acc_ref[...] = contrib
                first = False
            else:
                acc_ref[...] += contrib

    out = acc_ref[...] + b_ref[0][None, :].astype(jnp.float32)
    o_ref[0] = out.reshape(th, Wo, Co).astype(o_ref.dtype)


def _conv3x3_stride2_nhwc(x_nhwc, w_oihw, bias, *, compute_dtype=None,
                          strip_budget_bytes=4 << 20):
    N, H, W, C = x_nhwc.shape
    assert H % 2 == 0 and W % 2 == 0, "even spatial dims required"  # TODO(synk): odd H/W
    Co, Ci, kh, kw = w_oihw.shape
    assert Ci == C and kh == 3 and kw == 3
    Ho, Wo = H // 2, W // 2
    cdt = jnp.dtype(compute_dtype) if compute_dtype is not None else x_nhwc.dtype

    # padding=1 (single extra HBM copy); the parity reshape below is a free view.
    xp = jnp.pad(x_nhwc, ((0, 0), (1, 1), (1, 1), (0, 0)))
    xp2 = xp.reshape(N, Ho + 1, 2, Wo + 1, 2 * C).astype(cdt)

    # weights: OIHW -> HWIO -> tap-major (9, C, Co); bias kept in f32.
    w9 = jnp.transpose(w_oihw, (2, 3, 1, 0)).reshape(9, C, Co).astype(cdt)
    b2 = bias.reshape(1, Co).astype(jnp.float32)

    isz = jnp.dtype(cdt).itemsize
    osz = jnp.dtype(x_nhwc.dtype).itemsize
    per_row = (4 * (Wo + 1) * C * isz       # packed input pair-row (both parities)
               + Wo * Co * (osz + 4)        # output row + f32 accumulator row
               + Wo * 9 * C * 4)            # per-tap patch intermediates
    th = _choose_strip_height(Ho, per_row, budget_bytes=strip_budget_bytes)
    grid = (N, Ho // th)

    return pl.pallas_call(
        _conv3x3_s2_kernel,
        out_shape=jax.ShapeDtypeStruct((N, Ho, Wo, Co), x_nhwc.dtype),
        grid_spec=pltpu.PrefetchScalarGridSpec(
            num_scalar_prefetch=0,
            grid=grid,
            in_specs=[
                # body pair-rows of the strip
                pl.BlockSpec((1, th, 2, Wo + 1, 2 * C),
                             lambda n, i: (n, i, 0, 0, 0)),
                # halo pair-row just below the strip (block size 1 => element index)
                pl.BlockSpec((1, 1, 2, Wo + 1, 2 * C),
                             lambda n, i: (n, (i + 1) * th, 0, 0, 0)),
                pl.BlockSpec((9, C, Co), lambda n, i: (0, 0, 0)),
                pl.BlockSpec((1, Co), lambda n, i: (0, 0)),
            ],
            out_specs=pl.BlockSpec((1, th, Wo, Co), lambda n, i: (n, i, 0, 0)),
            scratch_shapes=[pltpu.VMEM((th * Wo, Co), jnp.float32)],
        ),
        compiler_params=pltpu.CompilerParams(
            dimension_semantics=("parallel", "parallel")),
    )(xp2, xp2, w9, b2)


# --------------------------------------------------------------------------
# Kernel 2: 2x2 average pool, stride 2 (use_conv=False path).
# Input is the same free-view parity packing (no padding needed):
#   x5[n, ho, a, wo, b*C + c] = x[n, 2*ho + a, 2*wo + b, c]
# so the pool is two adds and a scale - no strided slices, no transposes.
# --------------------------------------------------------------------------
def _avgpool2x2_kernel(x_ref, o_ref):
    C = o_ref.shape[-1]
    x = x_ref[0].astype(jnp.float32)          # (th, 2, Wo, 2C)
    s = x[:, 0] + x[:, 1]                     # pool the row pair
    o_ref[0] = ((s[..., :C] + s[..., C:]) * 0.25).astype(o_ref.dtype)


def _avgpool2x2_nhwc(x_nhwc, *, strip_budget_bytes=4 << 20):
    N, H, W, C = x_nhwc.shape
    assert H % 2 == 0 and W % 2 == 0, "even spatial dims required"  # TODO(synk): odd H/W
    Ho, Wo = H // 2, W // 2
    x5 = x_nhwc.reshape(N, Ho, 2, Wo, 2 * C)  # free view
    isz = jnp.dtype(x_nhwc.dtype).itemsize
    per_row = 4 * Wo * C * isz + Wo * C * isz + Wo * C * 4
    th = _choose_strip_height(Ho, per_row, budget_bytes=strip_budget_bytes)
    grid = (N, Ho // th)

    return pl.pallas_call(
        _avgpool2x2_kernel,
        out_shape=jax.ShapeDtypeStruct((N, Ho, Wo, C), x_nhwc.dtype),
        grid_spec=pltpu.PrefetchScalarGridSpec(
            num_scalar_prefetch=0,
            grid=grid,
            in_specs=[pl.BlockSpec((1, th, 2, Wo, 2 * C),
                                   lambda n, i: (n, i, 0, 0, 0))],
            out_specs=pl.BlockSpec((1, th, Wo, C), lambda n, i: (n, i, 0, 0)),
        ),
        compiler_params=pltpu.CompilerParams(
            dimension_semantics=("parallel", "parallel")),
    )(x5)


# --------------------------------------------------------------------------
# Module wrapper (parameters initialized deterministically in-script).
# --------------------------------------------------------------------------
class Downsample:
    """Pallas/TPU port of mediffusion Downsample (dims=2)."""

    def __init__(self, channels, use_conv, dims=2, out_channels=None, key=None,
                 compute_dtype=None):
        assert dims == 2, "only dims=2 implemented"  # TODO(synk): dims=1 / dims=3 variants
        self.channels = channels
        self.out_channels = out_channels or channels
        self.use_conv = use_conv
        self.compute_dtype = compute_dtype  # e.g. jnp.bfloat16 for bf16 MXU matmuls
        if use_conv:
            key = jax.random.PRNGKey(0) if key is None else key
            kw, kb = jax.random.split(key)
            fan_in = channels * 3 * 3
            bound = 1.0 / float(fan_in) ** 0.5
            # PyTorch Conv2d default-style init (uniform), OIHW weight layout.
            self.weight_oihw = jax.random.uniform(
                kw, (self.out_channels, channels, 3, 3), jnp.float32,
                minval=-bound, maxval=bound)
            self.bias = jax.random.uniform(
                kb, (self.out_channels,), jnp.float32,
                minval=-bound, maxval=bound)
        else:
            assert self.channels == self.out_channels

    def __call__(self, x_nchw):
        assert x_nchw.shape[1] == self.channels
        # NOTE: keep the surrounding model NHWC to drop these two transposes
        # (each one is a full HBM round trip for a mem-bound op).
        x_nhwc = jnp.transpose(x_nchw, (0, 2, 3, 1))
        if self.use_conv:
            out = _conv3x3_stride2_nhwc(x_nhwc, self.weight_oihw, self.bias,
                                        compute_dtype=self.compute_dtype)
        else:
            out = _avgpool2x2_nhwc(x_nhwc)
        return jnp.transpose(out, (0, 3, 1, 2))


if __name__ == "__main__":
    key = jax.random.PRNGKey(0)
    kx, kp = jax.random.split(key)
    N, C, H, W = 2, 4, 16, 16
    x = jax.random.normal(kx, (N, C, H, W), jnp.float32)

    # --- use_conv=True: 3x3 stride-2 conv, padding=1 ---
    mod = Downsample(channels=C, use_conv=True, dims=2, key=kp)
    y = jax.block_until_ready(mod(x))
    assert y.shape == (N, C, H // 2, W // 2)

    y_ref = lax.conv_general_dilated(
        x, mod.weight_oihw, window_strides=(2, 2), padding=((1, 1), (1, 1)),
        dimension_numbers=("NCHW", "OIHW", "NCHW"),
    ) + mod.bias[None, :, None, None]
    # MXU default-precision matmuls on both sides -> loose but bug-catching tol
    # (a misaligned tap would produce O(0.3-1.0) errors).
    assert jnp.allclose(y, y_ref, rtol=2e-2, atol=2e-2), \
        float(jnp.max(jnp.abs(y - y_ref)))

    # --- use_conv=False: 2x2 average pool, stride 2 ---
    mod2 = Downsample(channels=C, use_conv=False)
    y2 = jax.block_until_ready(mod2(x))
    assert y2.shape == (N, C, H // 2, W // 2)
    y2_ref = x.reshape(N, C, H // 2, 2, W // 2, 2).mean(axis=(3, 5))
    assert jnp.allclose(y2, y2_ref, rtol=1e-5, atol=1e-5), \
        float(jnp.max(jnp.abs(y2 - y2_ref)))

    print("KERNEL_OK")
</pallas_src>

<mosaic_0001>
module attributes {stable_mosaic.version = 11 : i64} {
  func.func @_conv3x3_s2_kernel(%arg0: i32, %arg1: i32, %arg2: memref<1x8x2x9x8xf32, #tpu.memory_space<vmem>>, %arg3: memref<1x1x2x9x8xf32, #tpu.memory_space<vmem>>, %arg4: memref<9x4x4xf32, #tpu.memory_space<vmem>>, %arg5: memref<1x4xf32, #tpu.memory_space<vmem>>, %arg6: memref<1x8x8x4xf32, #tpu.memory_space<vmem>>, %arg7: memref<64x4xf32, #tpu.memory_space<vmem>>) attributes {dimension_semantics = [#tpu.dimension_semantics<parallel>, #tpu.dimension_semantics<parallel>], iteration_bounds = array<i64: 2, 1>, scalar_prefetch = 0 : i64, scratch_operands = 1 : i64, tpu.core_type = #tpu.core_type<tc>, window_params = [{transform_indices = @transform_0, window_bounds = array<i64: 1, 8, 2, 9, 8>}, {transform_indices = @transform_1, window_bounds = array<i64: 1, 1, 2, 9, 8>}, {pipeline_mode = #tpu.pipeline_mode<synchronous>, transform_indices = @transform_2, window_bounds = array<i64: 9, 4, 4>}, {pipeline_mode = #tpu.pipeline_mode<synchronous>, transform_indices = @transform_3, window_bounds = array<i64: 1, 4>}, {transform_indices = @transform_4, window_bounds = array<i64: 1, 8, 8, 4>}]} {
    %c0 = arith.constant 0 : index
    %c0_0 = arith.constant 0 : index
    %c0_1 = arith.constant 0 : index
    %c0_2 = arith.constant 0 : index
    %c0_3 = arith.constant 0 : index
    %0 = vector.load %arg2[%c0, %c0_0, %c0_1, %c0_2, %c0_3] : memref<1x8x2x9x8xf32, #tpu.memory_space<vmem>>, vector<1x8x2x9x8xf32>
    %1 = vector.shape_cast %0 : vector<1x8x2x9x8xf32> to vector<8x2x9x8xf32>
    %c0_4 = arith.constant 0 : index
    %c0_5 = arith.constant 0 : index
    %c0_6 = arith.constant 0 : index
    %c0_7 = arith.constant 0 : index
    %c0_8 = arith.constant 0 : index
    %2 = vector.load %arg3[%c0_4, %c0_5, %c0_6, %c0_7, %c0_8] : memref<1x1x2x9x8xf32, #tpu.memory_space<vmem>>, vector<1x1x2x9x8xf32>
    %3 = vector.shape_cast %2 : vector<1x1x2x9x8xf32> to vector<1x2x9x8xf32>
    %4 = vector.extract_strided_slice %1 {offsets = [0, 0, 0, 0], sizes = [8, 1, 9, 8], strides = [1, 1, 1, 1]} : vector<8x2x9x8xf32> to vector<8x1x9x8xf32>
    %5 = vector.shape_cast %4 : vector<8x1x9x8xf32> to vector<8x9x8xf32>
    %6 = vector.extract_strided_slice %3 {offsets = [0, 0, 0, 0], sizes = [1, 1, 9, 8], strides = [1, 1, 1, 1]} : vector<1x2x9x8xf32> to vector<1x1x9x8xf32>
    %7 = vector.shape_cast %6 : vector<1x1x9x8xf32> to vector<1x9x8xf32>
    %8 = tpu.concatenate %5, %7 in 0 : vector<8x9x8xf32>, vector<1x9x8xf32> -> vector<9x9x8xf32>
    %9 = vector.extract_strided_slice %1 {offsets = [0, 1, 0, 0], sizes = [8, 1, 9, 8], strides = [1, 1, 1, 1]} : vector<8x2x9x8xf32> to vector<8x1x9x8xf32>
    %10 = vector.shape_cast %9 : vector<8x1x9x8xf32> to vector<8x9x8xf32>
    %11 = vector.extract_strided_slice %8 {offsets = [0, 0, 0], sizes = [8, 9, 8], strides = [1, 1, 1]} : vector<9x9x8xf32> to vector<8x9x8xf32>
    %12 = vector.extract_strided_slice %11 {offsets = [0, 0, 0], sizes = [8, 8, 4], strides = [1, 1, 1]} : vector<8x9x8xf32> to vector<8x8x4xf32>
    %13 = vector.shape_cast %12 : vector<8x8x4xf32> to vector<64x4xf32>
    %c0_9 = arith.constant 0 : index
    %c0_10 = arith.constant 0 : index
    %c0_11 = arith.constant 0 : index
    %14 = vector.load %arg4[%c0_9, %c0_10, %c0_11] : memref<9x4x4xf32, #tpu.memory_space<vmem>>, vector<1x4x4xf32>
    %15 = vector.shape_cast %14 : vector<1x4x4xf32> to vector<4x4xf32>
    %cst = arith.constant dense<0.000000e+00> : vector<64x4xf32>
    %16 = tpu.matmul %13, %15, %cst {dimension_numbers = #tpu.dot_dimension_numbers<[1], [0], [0], [1], [0, 0, 1, 1], [], []>} : vector<64x4xf32>, vector<4x4xf32>, vector<64x4xf32> -> vector<64x4xf32>
    %c0_12 = arith.constant 0 : index
    %c0_13 = arith.constant 0 : index
    %17 = vector.load %arg7[%c0_12, %c0_13] : memref<64x4xf32, #tpu.memory_space<vmem>>, vector<64x4xf32>
    tpu.vector_store %arg7[%c0_12, %c0_13], %16 {strides = array<i32>} : memref<64x4xf32, #tpu.memory_space<vmem>>, vector<64x4xf32>,
    %18 = vector.extract_strided_slice %11 {offsets = [0, 0, 4], sizes = [8, 8, 4], strides = [1, 1, 1]} : vector<8x9x8xf32> to vector<8x8x4xf32>
    %19 = vector.shape_cast %18 : vector<8x8x4xf32> to vector<64x4xf32>
    %c1 = arith.constant 1 : index
    %c0_14 = arith.constant 0 : index
    %c0_15 = arith.constant 0 : index
    %20 = vector.load %arg4[%c1, %c0_14, %c0_15] : memref<9x4x4xf32, #tpu.memory_space<vmem>>, vector<1x4x4xf32>
    %21 = vector.shape_cast %20 : vector<1x4x4xf32> to vector<4x4xf32>
    %cst_16 = arith.constant dense<0.000000e+00> : vector<64x4xf32>
    %22 = tpu.matmul %19, %21, %cst_16 {dimension_numbers = #tpu.dot_dimension_numbers<[1], [0], [0], [1], [0, 0, 1, 1], [], []>} : vector<64x4xf32>, vector<4x4xf32>, vector<64x4xf32> -> vector<64x4xf32>
    %c0_17 = arith.constant 0 : index
    %c0_18 = arith.constant 0 : index
    %23 = vector.load %arg7[%c0_17, %c0_18] : memref<64x4xf32, #tpu.memory_space<vmem>>, vector<64x4xf32>
    %24 = arith.addf %23, %22 : vector<64x4xf32>
    %c0_19 = arith.constant 0 : index
    %c0_20 = arith.constant 0 : index
    %25 = vector.load %arg7[%c0_19, %c0_20] : memref<64x4xf32, #tpu.memory_space<vmem>>, vector<64x4xf32>
    tpu.vector_store %arg7[%c0_19, %c0_20], %24 {strides = array<i32>} : memref<64x4xf32, #tpu.memory_space<vmem>>, vector<64x4xf32>,
    %26 = vector.extract_strided_slice %11 {offsets = [0, 1, 0], sizes = [8, 8, 4], strides = [1, 1, 1]} : vector<8x9x8xf32> to vector<8x8x4xf32>
    %27 = vector.shape_cast %26 : vector<8x8x4xf32> to vector<64x4xf32>
    %c2 = arith.constant 2 : index
    %c0_21 = arith.constant 0 : index
    %c0_22 = arith.constant 0 : index
    %28 = vector.load %arg4[%c2, %c0_21, %c0_22] : memref<9x4x4xf32, #tpu.memory_space<vmem>>, vector<1x4x4xf32>
    %29 = vector.shape_cast %28 : vector<1x4x4xf32> to vector<4x4xf32>
    %cst_23 = arith.constant dense<0.000000e+00> : vector<64x4xf32>
    %30 = tpu.matmul %27, %29, %cst_23 {dimension_numbers = #tpu.dot_dimension_numbers<[1], [0], [0], [1], [0, 0, 1, 1], [], []>} : vector<64x4xf32>, vector<4x4xf32>, vector<64x4xf32> -> vector<64x4xf32>
    %c0_24 = arith.constant 0 : index
    %c0_25 = arith.constant 0 : index
    %31 = vector.load %arg7[%c0_24, %c0_25] : memref<64x4xf32, #tpu.memory_space<vmem>>, vector<64x4xf32>
    %32 = arith.addf %31, %30 : vector<64x4xf32>
    %c0_26 = arith.constant 0 : index
    %c0_27 = arith.constant 0 : index
    %33 = vector.load %arg7[%c0_26, %c0_27] : memref<64x4xf32, #tpu.memory_space<vmem>>, vector<64x4xf32>
    tpu.vector_store %arg7[%c0_26, %c0_27], %32 {strides = array<i32>} : memref<64x4xf32, #tpu.memory_space<vmem>>, vector<64x4xf32>,
    %34 = vector.extract_strided_slice %10 {offsets = [0, 0, 0], sizes = [8, 8, 4], strides = [1, 1, 1]} : vector<8x9x8xf32> to vector<8x8x4xf32>
    %35 = vector.shape_cast %34 : vector<8x8x4xf32> to vector<64x4xf32>
    %c3 = arith.constant 3 : index
    %c0_28 = arith.constant 0 : index
    %c0_29 = arith.constant 0 : index
    %36 = vector.load %arg4[%c3, %c0_28, %c0_29] : memref<9x4x4xf32, #tpu.memory_space<vmem>>, vector<1x4x4xf32>
    %37 = vector.shape_cast %36 : vector<1x4x4xf32> to vector<4x4xf32>
    %cst_30 = arith.constant dense<0.000000e+00> : vector<64x4xf32>
    %38 = tpu.matmul %35, %37, %cst_30 {dimension_numbers = #tpu.dot_dimension_numbers<[1], [0], [0], [1], [0, 0, 1, 1], [], []>} : vector<64x4xf32>, vector<4x4xf32>, vector<64x4xf32> -> vector<64x4xf32>
    %c0_31 = arith.constant 0 : index
    %c0_32 = arith.constant 0 : index
    %39 = vector.load %arg7[%c0_31, %c0_32] : memref<64x4xf32, #tpu.memory_space<vmem>>, vector<64x4xf32>
    %40 = arith.addf %39, %38 : vector<64x4xf32>
    %c0_33 = arith.constant 0 : index
    %c0_34 = arith.constant 0 : index
    %41 = vector.load %arg7[%c0_33, %c0_34] : memref<64x4xf32, #tpu.memory_space<vmem>>, vector<64x4xf32>
    tpu.vector_store %arg7[%c0_33, %c0_34], %40 {strides = array<i32>} : memref<64x4xf32, #tpu.memory_space<vmem>>, vector<64x4xf32>,
    %42 = vector.extract_strided_slice %10 {offsets = [0, 0, 4], sizes = [8, 8, 4], strides = [1, 1, 1]} : vector<8x9x8xf32> to vector<8x8x4xf32>
    %43 = vector.shape_cast %42 : vector<8x8x4xf32> to vector<64x4xf32>
    %c4 = arith.constant 4 : index
    %c0_35 = arith.constant 0 : index
    %c0_36 = arith.constant 0 : index
    %44 = vector.load %arg4[%c4, %c0_35, %c0_36] : memref<9x4x4xf32, #tpu.memory_space<vmem>>, vector<1x4x4xf32>
    %45 = vector.shape_cast %44 : vector<1x4x4xf32> to vector<4x4xf32>
    %cst_37 = arith.constant dense<0.000000e+00> : vector<64x4xf32>
    %46 = tpu.matmul %43, %45, %cst_37 {dimension_numbers = #tpu.dot_dimension_numbers<[1], [0], [0], [1], [0, 0, 1, 1], [], []>} : vector<64x4xf32>, vector<4x4xf32>, vector<64x4xf32> -> vector<64x4xf32>
    %c0_38 = arith.constant 0 : index
    %c0_39 = arith.constant 0 : index
    %47 = vector.load %arg7[%c0_38, %c0_39] : memref<64x4xf32, #tpu.memory_space<vmem>>, vector<64x4xf32>
    %48 = arith.addf %47, %46 : vector<64x4xf32>
    %c0_40 = arith.constant 0 : index
    %c0_41 = arith.constant 0 : index
    %49 = vector.load %arg7[%c0_40, %c0_41] : memref<64x4xf32, #tpu.memory_space<vmem>>, vector<64x4xf32>
    tpu.vector_store %arg7[%c0_40, %c0_41], %48 {strides = array<i32>} : memref<64x4xf32, #tpu.memory_space<vmem>>, vector<64x4xf32>,
    %50 = vector.extract_strided_slice %10 {offsets = [0, 1, 0], sizes = [8, 8, 4], strides = [1, 1, 1]} : vector<8x9x8xf32> to vector<8x8x4xf32>
    %51 = vector.shape_cast %50 : vector<8x8x4xf32> to vector<64x4xf32>
    %c5 = arith.constant 5 : index
    %c0_42 = arith.constant 0 : index
    %c0_43 = arith.constant 0 : index
    %52 = vector.load %arg4[%c5, %c0_42, %c0_43] : memref<9x4x4xf32, #tpu.memory_space<vmem>>, vector<1x4x4xf32>
    %53 = vector.shape_cast %52 : vector<1x4x4xf32> to vector<4x4xf32>
    %cst_44 = arith.constant dense<0.000000e+00> : vector<64x4xf32>
    %54 = tpu.matmul %51, %53, %cst_44 {dimension_numbers = #tpu.dot_dimension_numbers<[1], [0], [0], [1], [0, 0, 1, 1], [], []>} : vector<64x4xf32>, vector<4x4xf32>, vector<64x4xf32> -> vector<64x4xf32>
    %c0_45 = arith.constant 0 : index
    %c0_46 = arith.constant 0 : index
    %55 = vector.load %arg7[%c0_45, %c0_46] : memref<64x4xf32, #tpu.memory_space<vmem>>, vector<64x4xf32>
    %56 = arith.addf %55, %54 : vector<64x4xf32>
    %c0_47 = arith.constant 0 : index
    %c0_48 = arith.constant 0 : index
    %57 = vector.load %arg7[%c0_47, %c0_48] : memref<64x4xf32, #tpu.memory_space<vmem>>, vector<64x4xf32>
    tpu.vector_store %arg7[%c0_47, %c0_48], %56 {strides = array<i32>} : memref<64x4xf32, #tpu.memory_space<vmem>>, vector<64x4xf32>,
    %58 = vector.extract_strided_slice %8 {offsets = [1, 0, 0], sizes = [8, 9, 8], strides = [1, 1, 1]} : vector<9x9x8xf32> to vector<8x9x8xf32>
    %59 = vector.extract_strided_slice %58 {offsets = [0, 0, 0], sizes = [8, 8, 4], strides = [1, 1, 1]} : vector<8x9x8xf32> to vector<8x8x4xf32>
    %60 = vector.shape_cast %59 : vector<8x8x4xf32> to vector<64x4xf32>
    %c6 = arith.constant 6 : index
    %c0_49 = arith.constant 0 : index
    %c0_50 = arith.constant 0 : index
    %61 = vector.load %arg4[%c6, %c0_49, %c0_50] : memref<9x4x4xf32, #tpu.memory_space<vmem>>, vector<1x4x4xf32>
    %62 = vector.shape_cast %61 : vector<1x4x4xf32> to vector<4x4xf32>
    %cst_51 = arith.constant dense<0.000000e+00> : vector<64x4xf32>
    %63 = tpu.matmul %60, %62, %cst_51 {dimension_numbers = #tpu.dot_dimension_numbers<[1], [0], [0], [1], [0, 0, 1, 1], [], []>} : vector<64x4xf32>, vector<4x4xf32>, vector<64x4xf32> -> vector<64x4xf32>
    %c0_52 = arith.constant 0 : index
    %c0_53 = arith.constant 0 : index
    %64 = vector.load %arg7[%c0_52, %c0_53] : memref<64x4xf32, #tpu.memory_space<vmem>>, vector<64x4xf32>
    %65 = arith.addf %64, %63 : vector<64x4xf32>
    %c0_54 = arith.constant 0 : index
    %c0_55 = arith.constant 0 : index
    %66 = vector.load %arg7[%c0_54, %c0_55] : memref<64x4xf32, #tpu.memory_space<vmem>>, vector<64x4xf32>
    tpu.vector_store %arg7[%c0_54, %c0_55], %65 {strides = array<i32>} : memref<64x4xf32, #tpu.memory_space<vmem>>, vector<64x4xf32>,
    %67 = vector.extract_strided_slice %58 {offsets = [0, 0, 4], sizes = [8, 8, 4], strides = [1, 1, 1]} : vector<8x9x8xf32> to vector<8x8x4xf32>
    %68 = vector.shape_cast %67 : vector<8x8x4xf32> to vector<64x4xf32>
    %c7 = arith.constant 7 : index
    %c0_56 = arith.constant 0 : index
    %c0_57 = arith.constant 0 : index
    %69 = vector.load %arg4[%c7, %c0_56, %c0_57] : memref<9x4x4xf32, #tpu.memory_space<vmem>>, vector<1x4x4xf32>
    %70 = vector.shape_cast %69 : vector<1x4x4xf32> to vector<4x4xf32>
    %cst_58 = arith.constant dense<0.000000e+00> : vector<64x4xf32>
    %71 = tpu.matmul %68, %70, %cst_58 {dimension_numbers = #tpu.dot_dimension_numbers<[1], [0], [0], [1], [0, 0, 1, 1], [], []>} : vector<64x4xf32>, vector<4x4xf32>, vector<64x4xf32> -> vector<64x4xf32>
    %c0_59 = arith.constant 0 : index
    %c0_60 = arith.constant 0 : index
    %72 = vector.load %arg7[%c0_59, %c0_60] : memref<64x4xf32, #tpu.memory_space<vmem>>, vector<64x4xf32>
    %73 = arith.addf %72, %71 : vector<64x4xf32>
    %c0_61 = arith.constant 0 : index
    %c0_62 = arith.constant 0 : index
    %74 = vector.load %arg7[%c0_61, %c0_62] : memref<64x4xf32, #tpu.memory_space<vmem>>, vector<64x4xf32>
    tpu.vector_store %arg7[%c0_61, %c0_62], %73 {strides = array<i32>} : memref<64x4xf32, #tpu.memory_space<vmem>>, vector<64x4xf32>,
    %75 = vector.extract_strided_slice %58 {offsets = [0, 1, 0], sizes = [8, 8, 4], strides = [1, 1, 1]} : vector<8x9x8xf32> to vector<8x8x4xf32>
    %76 = vector.shape_cast %75 : vector<8x8x4xf32> to vector<64x4xf32>
    %c8 = arith.constant 8 : index
    %c0_63 = arith.constant 0 : index
    %c0_64 = arith.constant 0 : index
    %77 = vector.load %arg4[%c8, %c0_63, %c0_64] : memref<9x4x4xf32, #tpu.memory_space<vmem>>, vector<1x4x4xf32>
    %78 = vector.shape_cast %77 : vector<1x4x4xf32> to vector<4x4xf32>
    %cst_65 = arith.constant dense<0.000000e+00> : vector<64x4xf32>
    %79 = tpu.matmul %76, %78, %cst_65 {dimension_numbers = #tpu.dot_dimension_numbers<[1], [0], [0], [1], [0, 0, 1, 1], [], []>} : vector<64x4xf32>, vector<4x4xf32>, vector<64x4xf32> -> vector<64x4xf32>
    %c0_66 = arith.constant 0 : index
    %c0_67 = arith.constant 0 : index
    %80 = vector.load %arg7[%c0_66, %c0_67] : memref<64x4xf32, #tpu.memory_space<vmem>>, vector<64x4xf32>
    %81 = arith.addf %80, %79 : vector<64x4xf32>
    %c0_68 = arith.constant 0 : index
    %c0_69 = arith.constant 0 : index
    %82 = vector.load %arg7[%c0_68, %c0_69] : memref<64x4xf32, #tpu.memory_space<vmem>>, vector<64x4xf32>
    tpu.vector_store %arg7[%c0_68, %c0_69], %81 {strides = array<i32>} : memref<64x4xf32, #tpu.memory_space<vmem>>, vector<64x4xf32>,
    %c0_70 = arith.constant 0 : index
    %c0_71 = arith.constant 0 : index
    %83 = vector.load %arg7[%c0_70, %c0_71] : memref<64x4xf32, #tpu.memory_space<vmem>>, vector<64x4xf32>
    %c0_72 = arith.constant 0 : index
    %c0_73 = arith.constant 0 : index
    %84 = vector.load %arg5[%c0_72, %c0_73] : memref<1x4xf32, #tpu.memory_space<vmem>>, vector<1x4xf32>
    %85 = vector.shape_cast %84 : vector<1x4xf32> to vector<4xf32>
    %86 = vector.shape_cast %85 : vector<4xf32> to vector<1x4xf32>
    %87 = vector.broadcast %86 : vector<1x4xf32> to vector<64x4xf32>
    %88 = arith.addf %83, %87 : vector<64x4xf32>
    %89 = vector.shape_cast %88 : vector<64x4xf32> to vector<8x8x4xf32>
    %c0_74 = arith.constant 0 : index
    %c0_75 = arith.constant 0 : index
    %c0_76 = arith.constant 0 : index
    %c0_77 = arith.constant 0 : index
    %90 = vector.load %arg6[%c0_74, %c0_75, %c0_76, %c0_77] : memref<1x8x8x4xf32, #tpu.memory_space<vmem>>, vector<1x8x8x4xf32>
    %91 = vector.shape_cast %90 : vector<1x8x8x4xf32> to vector<8x8x4xf32>
    %92 = vector.shape_cast %89 : vector<8x8x4xf32> to vector<1x8x8x4xf32>
    tpu.vector_store %arg6[%c0_74, %c0_75, %c0_76, %c0_77], %92 {strides = array<i32>} : memref<1x8x8x4xf32, #tpu.memory_space<vmem>>, vector<1x8x8x4xf32>,
    return
  }
  func.func @transform_0(%arg0: i32, %arg1: i32) -> (i32, i32, i32, i32, i32) {
    %c0_i32 = arith.constant 0 : i32
    %c0_i32_0 = arith.constant 0 : i32
    %c0_i32_1 = arith.constant 0 : i32
    %c0_i32_2 = arith.constant 0 : i32
    return %arg0, %arg1, %c0_i32, %c0_i32_0, %c0_i32_1 : i32, i32, i32, i32, i32
  }
  func.func @transform_1(%arg0: i32, %arg1: i32) -> (i32, i32, i32, i32, i32) {
    %c1_i32 = arith.constant 1 : i32
    %0 = arith.addi %arg1, %c1_i32 : i32
    %c8_i32 = arith.constant 8 : i32
    %1 = arith.muli %0, %c8_i32 : i32
    %c0_i32 = arith.constant 0 : i32
    %c0_i32_0 = arith.constant 0 : i32
    %c0_i32_1 = arith.constant 0 : i32
    %c0_i32_2 = arith.constant 0 : i32
    return %arg0, %1, %c0_i32, %c0_i32_0, %c0_i32_1 : i32, i32, i32, i32, i32
  }
  func.func @transform_2(%arg0: i32, %arg1: i32) -> (i32, i32, i32) {
    %c0_i32 = arith.constant 0 : i32
    %c0_i32_0 = arith.constant 0 : i32
    %c0_i32_1 = arith.constant 0 : i32
    %c0_i32_2 = arith.constant 0 : i32
    return %c0_i32, %c0_i32_0, %c0_i32_1 : i32, i32, i32
  }
  func.func @transform_3(%arg0: i32, %arg1: i32) -> (i32, i32) {
    %c0_i32 = arith.constant 0 : i32
    %c0_i32_0 = arith.constant 0 : i32
    %c0_i32_1 = arith.constant 0 : i32
    return %c0_i32, %c0_i32_0 : i32, i32
  }
  func.func @transform_4(%arg0: i32, %arg1: i32) -> (i32, i32, i32, i32) {
    %c0_i32 = arith.constant 0 : i32
    %c0_i32_0 = arith.constant 0 : i32
    %c0_i32_1 = arith.constant 0 : i32
    return %arg0, %arg1, %c0_i32, %c0_i32_0 : i32, i32, i32, i32
  }
}

</mosaic_0001>

<llo_original>
// kernel: tpu_custom_call.1
$region0: #{tpu_custom_call.1}
  #allocation0 [shape = 'u32[]', space=smem, size = 0x4, offset = 0x4, fixed_abs, tag = 'smem constant byte address 0x4 - core index']
  #allocation1 [shape = 'u32[144,128]{1,0:T(1,128)}', space=vmem, size = 0x12000, scoped, tag = 'internal scratch']
  #allocation2 [shape = 'f32[64,4]{1,0:T(8,128)}', space=vmem, size = 0x8000, scoped, tag = 'scratch operand']
  %s0 = inlined_call_operand.vmem [shape: f32[2,9,2,9,8], index: 0, kind: input, shape index: {}]
  %s1 = inlined_call_operand.vmem [shape: f32[2,9,2,9,8], index: 1, kind: input, shape index: {}]
  %s2 = inlined_call_operand.vmem [shape: f32[9,4,4], index: 2, kind: input, shape index: {}]
  %s3 = inlined_call_operand.vmem [shape: f32[1,4], index: 3, kind: input, shape index: {}]
  %s4 = inlined_call_operand.vmem [shape: f32[2,8,8,4], index: 4, kind: output, shape index: {}]
  %s5 = sld [smem:[#allocation0]]
  $region49: #{tpu_custom_call.1} parent=0
    _
  %s7 = ssub.s32 1, %s5
  %s8 = scalar_select 0, %s7, %s5
  loop: start=0, step=1, limit=4
  $region2: #{tpu_custom_call.1} parent=0 // loop_pre_header
    _
  $region3: #{tpu_custom_call.1} parent=0 // loop_header
    %s10 = sphi 0, %s14
    %p11 = scmp.ge.s32.totalorder %s10, 4
    %s17 = sphi 0, %s29
    %s18 = sphi 0, %s25
    %s19 = sphi 0, %s17
    %s20 = sphi 0, %s18
    %s21 = sphi 0, %s19
    %s22 = sphi 0, %s20
    %s34 = sphi 0, %s36
    %s37 = sphi 0, %s34
    %s38 = sphi 0, %s37
    %s54 = sphi 0, %s38
    %s66 = sphi 0, %s68
    %s69 = sphi 0, %s66
    %s70 = sphi 0, %s69
    %s86 = sphi 0, %s70
    %s90 = sphi 0, %s90
    %s92 = sphi 0, %s90
    %s93 = sphi 0, %s92
    %s107 = sphi 0, %s93
    %s111 = sphi 0, %s111
    %s113 = sphi 0, %s111
    %s114 = sphi 0, %s113
    %s128 = sphi 0, %s114
    %s136 = sphi 0, %s138
    %s139 = sphi 0, %s136
    %s140 = sphi 0, %s139
    %s156 = sphi 0, %s140
  $region4: #{tpu_custom_call.1} parent=0 // loop_header_branch
    %13 = sbr.rel (%p11) target = $region8
  $region5: #{tpu_custom_call.1} parent=0 // loop_body
    %s15 = ssub.s32 %s10, 1
    %s16 = ssub.s32 %s10, 2
    %s23 = sadd.s32 1, %s18
    %p24 = scmp.ge.s32.totalorder %s23, 1
    %s25 = scalar_select %p24, 0, %s23
    %s26 = sadd.s32 1, %s17
    %s27 = scalar_select %p24, %s26, %s17
    %p28 = scmp.ge.s32.totalorder %s27, 2
    %s29 = scalar_select %p28, 0, %s27
    %s30 = ssub.s32 %s17, %s29
    %s31 = ssub.s32 %s18, %s25
    %s32 = sor.u32 %s30, %s31
    %p33 = scmp.eq.s32.totalorder %s32, 0
    %s35 = sadd.s32 %s34, 1
    %s36 = scalar_select %p33, %s34, %s35
    %p39 = pneg %p33
    %p40 = scmp.eq.s32.totalorder %s10, 1
    %p41 = por %p39, %p40
    %p42 = scmp.ne.s32.totalorder %s34, %s37
    %p43 = scmp.eq.s32.totalorder %s10, 0
    %p44 = por %p42, %p43
    %p45 = scmp.ne.s32.totalorder %s34, %s37
    %p46 = scmp.eq.s32.totalorder %s15, 1
    %p47 = por %p45, %p46
    %p48 = scmp.ne.s32.totalorder %s37, %s38
    %p49 = scmp.eq.s32.totalorder %s15, 0
    %p50 = por %p48, %p49
    %p51 = scmp.ne.s32.totalorder %s37, %s38
    %p52 = scmp.eq.s32.totalorder %s16, 1
    %p53 = por %p51, %p52
    %p55 = scmp.ne.s32.totalorder %s38, %s54
    %p56 = scmp.eq.s32.totalorder %s16, 0
    %p57 = por %p55, %p56
    %s58 = sadd.s32 %s18, 1
    %s59 = smul.u32 %s58, 8
    %s60 = sadd.s32 %s25, 1
    %s61 = smul.u32 %s60, 8
    %s62 = ssub.s32 %s17, %s29
    %s63 = ssub.s32 %s59, %s61
    %s64 = sor.u32 %s62, %s63
    %p65 = scmp.eq.s32.totalorder %s64, 0
    %s67 = sadd.s32 %s66, 1
    %s68 = scalar_select %p65, %s66, %s67
    %p71 = pneg %p65
    %p72 = scmp.eq.s32.totalorder %s10, 1
    %p73 = por %p71, %p72
    %p74 = scmp.ne.s32.totalorder %s66, %s69
    %p75 = scmp.eq.s32.totalorder %s10, 0
    %p76 = por %p74, %p75
    %p77 = scmp.ne.s32.totalorder %s66, %s69
    %p78 = scmp.eq.s32.totalorder %s15, 1
    %p79 = por %p77, %p78
    %p80 = scmp.ne.s32.totalorder %s69, %s70
    %p81 = scmp.eq.s32.totalorder %s15, 0
    %p82 = por %p80, %p81
    %p83 = scmp.ne.s32.totalorder %s69, %s70
    %p84 = scmp.eq.s32.totalorder %s16, 1
    %p85 = por %p83, %p84
    %p87 = scmp.ne.s32.totalorder %s70, %s86
    %p88 = scmp.eq.s32.totalorder %s16, 0
    %p89 = por %p87, %p88
    %s91 = sadd.s32 %s90, 1
    %p94 = scmp.eq.s32.totalorder %s10, 1
    %p95 = scmp.ne.s32.totalorder %s90, %s92
    %p96 = scmp.eq.s32.totalorder %s10, 0
    %p97 = por %p95, %p96
    %p98 = scmp.ne.s32.totalorder %s90, %s92
    %p99 = scmp.eq.s32.totalorder %s15, 1
    %p100 = por %p98, %p99
    %p101 = scmp.ne.s32.totalorder %s92, %s93
    %p102 = scmp.eq.s32.totalorder %s15, 0
    %p103 = por %p101, %p102
    %p104 = scmp.ne.s32.totalorder %s92, %s93
    %p105 = scmp.eq.s32.totalorder %s16, 1
    %p106 = por %p104, %p105
    %p108 = scmp.ne.s32.totalorder %s93, %s107
    %p109 = scmp.eq.s32.totalorder %s16, 0
    %p110 = por %p108, %p109
    %s112 = sadd.s32 %s111, 1
    %p115 = scmp.eq.s32.totalorder %s10, 1
    %p116 = scmp.ne.s32.totalorder %s111, %s113
    %p117 = scmp.eq.s32.totalorder %s10, 0
    %p118 = por %p116, %p117
    %p119 = scmp.ne.s32.totalorder %s111, %s113
    %p120 = scmp.eq.s32.totalorder %s15, 1
    %p121 = por %p119, %p120
    %p122 = scmp.ne.s32.totalorder %s113, %s114
    %p123 = scmp.eq.s32.totalorder %s15, 0
    %p124 = por %p122, %p123
    %p125 = scmp.ne.s32.totalorder %s113, %s114
    %p126 = scmp.eq.s32.totalorder %s16, 1
    %p127 = por %p125, %p126
    %p129 = scmp.ne.s32.totalorder %s114, %s128
    %p130 = scmp.eq.s32.totalorder %s16, 0
    %p131 = por %p129, %p130
    %s132 = ssub.s32 %s17, %s29
    %s133 = ssub.s32 %s18, %s25
    %s134 = sor.u32 %s132, %s133
    %p135 = scmp.eq.s32.totalorder %s134, 0
    %s137 = sadd.s32 %s136, 1
    %s138 = scalar_select %p135, %s136, %s137
    %p141 = pneg %p135
    %p142 = scmp.eq.s32.totalorder %s10, 1
    %p143 = por %p141, %p142
    %p144 = scmp.ne.s32.totalorder %s136, %s139
    %p145 = scmp.eq.s32.totalorder %s10, 0
    %p146 = por %p144, %p145
    %p147 = scmp.ne.s32.totalorder %s136, %s139
    %p148 = scmp.eq.s32.totalorder %s15, 1
    %p149 = por %p147, %p148
    %p150 = scmp.ne.s32.totalorder %s139, %s140
    %p151 = scmp.eq.s32.totalorder %s15, 0
    %p152 = por %p150, %p151
    %p153 = scmp.ne.s32.totalorder %s139, %s140
    %p154 = scmp.eq.s32.totalorder %s16, 1
    %p155 = por %p153, %p154
    %p157 = scmp.ne.s32.totalorder %s140, %s156
    %p158 = scmp.eq.s32.totalorder %s16, 0
    %p159 = por %p157, %p158
    %p160 = scmp.le.s32.totalorder 1, %s10
    %p161 = scmp.lt.s32.totalorder %s10, 3
    %p162 = pnand %p160, %p161
    %p163 = pneg %p162
    // Predicated region
    $region9: #{tpu_custom_call.1} parent=5 // pred_check
      _
    $region10: #{tpu_custom_call.1} parent=5 // pred_check_branch
      %165 = sbr.rel (%p162) target = $region12
    $region11: #{tpu_custom_call.1} parent=5 // pred_region
      %s166 = ssub.s32 %s10, 1
      // Predicated region
      $region13: #{tpu_custom_call.1} parent=11 // pred_check
        %p167 = pneg %p103
      $region14: #{tpu_custom_call.1} parent=11 // pred_check_branch
        %169 = sbr.rel (%p167) target = $region16
      $region15: #{tpu_custom_call.1} parent=11 // pred_region
        _
      $region16: #{tpu_custom_call.1} parent=11 // pred_fallthru
        _
      // Predicated region
      $region17: #{tpu_custom_call.1} parent=11 // pred_check
        %p170 = pneg %p124
      $region18: #{tpu_custom_call.1} parent=11 // pred_check_branch
        %172 = sbr.rel (%p170) target = $region20
      $region19: #{tpu_custom_call.1} parent=11 // pred_region
        _
      $region20: #{tpu_custom_call.1} parent=11 // pred_fallthru
        _
    $region12: #{tpu_custom_call.1} parent=5 // pred_fallthru
      _
    %p173 = scmp.lt.s32.totalorder %s10, 2
    // Predicated region
    $region21: #{tpu_custom_call.1} parent=5 // pred_check
      %p174 = pneg %p173
    $region22: #{tpu_custom_call.1} parent=5 // pred_check_branch
      %176 = sbr.rel (%p174) target = $region24
    $region23: #{tpu_custom_call.1} parent=5 // pred_region
      // Predicated region
      $region25: #{tpu_custom_call.1} parent=23 // pred_check
        %p177 = pneg %p44
      $region26: #{tpu_custom_call.1} parent=23 // pred_check_branch
        %179 = sbr.rel (%p177) target = $region28
      $region27: #{tpu_custom_call.1} parent=23 // pred_region
        %s180 = smul.u32 8, %s18
        %s181 = ssub.s32 9, %s180
        %p182 = scmp.lt.s32.totalorder %s181, 8
        %s183 = scalar_select %p182, %s181, 8
        %s184 = smul.u32 128, %s183
        %s185 = smul.u32 %s184, 2
        %s186 = smul.u32 %s185, 2
        %p187 = scmp.lt.s32.totalorder %s17, 1
        %s188 = scalar_select %p187, %s17, 1
        %p189 = scmp.lt.s32.totalorder %s180, 8
        %s190 = scalar_select %p189, %s180, 8
        %s191 = smul.addr %s190, 4
        %s192 = smul.addr %s188, 36
        %s193 = sadd.s32 %s191, %s192
        %s194 = smul.addr %s193, 8
        %s195 = scalar_lea.vmem %s0, %s194
        %s196 = smul.u32 8, %s18
        %s197 = ssub.s32 9, %s196
        %p198 = scmp.lt.s32.totalorder %s197, 8
        %s199 = scalar_select %p198, %s197, 8
        %s200 = smul.u32 128, %s199
        %s201 = smul.u32 %s200, 2
        %s202 = smul.u32 %s201, 2
      $region28: #{tpu_custom_call.1} parent=23 // pred_fallthru
        _
      // Predicated region
      $region29: #{tpu_custom_call.1} parent=23 // pred_check
        %p203 = pneg %p76
      $region30: #{tpu_custom_call.1} parent=23 // pred_check_branch
        %205 = sbr.rel (%p203) target = $region32
      $region31: #{tpu_custom_call.1} parent=23 // pred_region
        %s206 = sadd.s32 %s18, 1
        %s207 = smul.u32 %s206, 8
        %p208 = scmp.lt.s32.totalorder %s17, 1
        %s209 = scalar_select %p208, %s17, 1
        %p210 = scmp.lt.s32.totalorder %s207, 8
        %s211 = scalar_select %p210, %s207, 8
        %s212 = smul.addr %s211, 4
        %s213 = smul.addr %s209, 36
        %s214 = sadd.s32 %s212, %s213
        %s215 = smul.addr %s214, 8
        %s216 = scalar_lea.vmem %s1, %s215
        %s217 = sadd.s32 %s18, 1
        %s218 = smul.u32 %s217, 8
      $region32: #{tpu_custom_call.1} parent=23 // pred_fallthru
        _
    $region24: #{tpu_custom_call.1} parent=5 // pred_fallthru
      _
    %p219 = scmp.le.s32.totalorder 1, %s10
    %p220 = scmp.lt.s32.totalorder %s10, 3
    %p221 = pnand %p219, %p220
    %p222 = pneg %p221
    // Predicated region
    $region33: #{tpu_custom_call.1} parent=5 // pred_check
      _
    $region34: #{tpu_custom_call.1} parent=5 // pred_check_branch
      %224 = sbr.rel (%p221) target = $region36
    $region35: #{tpu_custom_call.1} parent=5 // pred_region
      %s225 = ssub.s32 %s10, 1
      %s226 = smul.u32 8, %s20
      %s227 = ssub.s32 9, %s226
      %p228 = scmp.lt.s32.totalorder %s227, 8
      %s229 = scalar_select %p228, %s227, 8
      %s230 = smul.u32 128, %s229
      %s231 = smul.u32 %s230, 2
      %s232 = smul.u32 %s231, 2
      %p233 = scmp.lt.s32.totalorder %s19, 1
      %s234 = scalar_select %p233, %s19, 1
      %p235 = scmp.lt.s32.totalorder %s226, 8
      %s236 = scalar_select %p235, %s226, 8
      %s237 = smul.addr %s236, 4
      %s238 = smul.addr %s234, 36
      %s239 = sadd.s32 %s237, %s238
      %s240 = smul.addr %s239, 8
      %s241 = scalar_lea.vmem %s0, %s240
      %p242 = pneg %p50
      %p243 = pneg %p47
      %s244 = sadd.s32 %s20, 1
      %s245 = smul.u32 %s244, 8
      %p246 = scmp.lt.s32.totalorder %s19, 1
      %s247 = scalar_select %p246, %s19, 1
      %p248 = scmp.lt.s32.totalorder %s245, 8
      %s249 = scalar_select %p248, %s245, 8
      %s250 = smul.addr %s249, 4
      %s251 = smul.addr %s247, 36
      %s252 = sadd.s32 %s250, %s251
      %s253 = smul.addr %s252, 8
      %s254 = scalar_lea.vmem %s1, %s253
      %p255 = pneg %p82
      %p256 = pneg %p79
      %p257 = pneg %p103
      %p258 = pneg %p100
      %p259 = pneg %p124
      %p260 = pneg %p121
      %p261 = pneg %p152
      %p262 = pneg %p149
      %s263 = smul.u32 8, %s20
      %p264 = scmp.lt.s32.totalorder %s19, 1
      %s265 = scalar_select %p264, %s19, 1
      %p266 = scmp.lt.s32.totalorder %s263, 7
      %s267 = scalar_select %p266, %s263, 7
      %s268 = smul.addr %s265, 8
      %s269 = sadd.s32 %s267, %s268
      %s270 = smul.addr %s269, 8
      %s271 = scalar_lea.vmem %s4, %s270
      %s272 = smul.u32 8, %s20
      %s273 = ssub.s32 9, %s272
      %p274 = scmp.lt.s32.totalorder %s273, 8
      %s275 = scalar_select %p274, %s273, 8
      %s276 = smul.u32 128, %s275
      %s277 = smul.u32 %s276, 2
      %s278 = smul.u32 %s277, 2
      %p279 = scmp.lt.s32.totalorder %s19, 1
      %s280 = scalar_select %p279, %s19, 1
      %p281 = scmp.lt.s32.totalorder %s272, 8
      %s282 = scalar_select %p281, %s272, 8
      %s283 = smul.addr %s282, 4
      %s284 = smul.addr %s280, 36
      %s285 = sadd.s32 %s283, %s284
      %s286 = smul.addr %s285, 8
      %s287 = scalar_lea.vmem %s0, %s286
      %s288 = smul.u32 8, %s20
      %s289 = ssub.s32 9, %s288
      %p290 = scmp.lt.s32.totalorder %s289, 8
      %s291 = scalar_select %p290, %s289, 8
      %s292 = smul.u32 128, %s291
      %s293 = smul.u32 %s292, 2
      %s294 = smul.u32 %s293, 2
      %s295 = sadd.s32 %s20, 1
      %s296 = smul.u32 %s295, 8
      %p297 = scmp.lt.s32.totalorder %s19, 1
      %s298 = scalar_select %p297, %s19, 1
      %p299 = scmp.lt.s32.totalorder %s296, 8
      %s300 = scalar_select %p299, %s296, 8
      %s301 = smul.addr %s300, 4
      %s302 = smul.addr %s298, 36
      %s303 = sadd.s32 %s301, %s302
      %s304 = smul.addr %s303, 8
      %s305 = scalar_lea.vmem %s1, %s304
      %s306 = sadd.s32 %s20, 1
      %s307 = smul.u32 %s306, 8
      %s308 = smul.u32 8, %s20
      %p309 = scmp.lt.s32.totalorder %s19, 1
      %s310 = scalar_select %p309, %s19, 1
      %p311 = scmp.lt.s32.totalorder %s308, 7
      %s312 = scalar_select %p311, %s308, 7
      %s313 = smul.addr %s310, 8
      %s314 = sadd.s32 %s312, %s313
      %s315 = smul.addr %s314, 8
      %s316 = scalar_lea.vmem %s4, %s315
      %s317 = smul.u32 8, %s20
      %v318 = vld [vmem:[%s287] sm:$0xff]
      %v319 = vld [vmem:[%s287 + $0x8] sm:$0x1]
      %v320 = vld [vmem:[%s287 + $0x10] sm:$0xff]
      %v321 = vld [vmem:[%s287 + $0x18] sm:$0x1]
      %v322 = vld [vmem:[%s287 + $0x20] sm:$0xff]
      %v323 = vld [vmem:[%s287 + $0x28] sm:$0x1]
      %v324 = vld [vmem:[%s287 + $0x30] sm:$0xff]
      %v325 = vld [vmem:[%s287 + $0x38] sm:$0x1]
      %v326 = vld [vmem:[%s287 + $0x40] sm:$0xff]
      %v327 = vld [vmem:[%s287 + $0x48] sm:$0x1]
      %v328 = vld [vmem:[%s287 + $0x50] sm:$0xff]
      %v329 = vld [vmem:[%s287 + $0x58] sm:$0x1]
      %v330 = vld [vmem:[%s287 + $0x60] sm:$0xff]
      %v331 = vld [vmem:[%s287 + $0x68] sm:$0x1]
      %v332 = vld [vmem:[%s287 + $0x70] sm:$0xff]
      %v333 = vld [vmem:[%s287 + $0x78] sm:$0x1]
      %v334 = vld [vmem:[%s287 + $0x80] sm:$0xff]
      %v335 = vld [vmem:[%s287 + $0x88] sm:$0x1]
      %v336 = vld [vmem:[%s287 + $0x90] sm:$0xff]
      %v337 = vld [vmem:[%s287 + $0x98] sm:$0x1]
      %v338 = vld [vmem:[%s287 + $0xa0] sm:$0xff]
      %v339 = vld [vmem:[%s287 + $0xa8] sm:$0x1]
      %v340 = vld [vmem:[%s287 + $0xb0] sm:$0xff]
      %v341 = vld [vmem:[%s287 + $0xb8] sm:$0x1]
      %v342 = vld [vmem:[%s287 + $0xc0] sm:$0xff]
      %v343 = vld [vmem:[%s287 + $0xc8] sm:$0x1]
      %v344 = vld [vmem:[%s287 + $0xd0] sm:$0xff]
      %v345 = vld [vmem:[%s287 + $0xd8] sm:$0x1]
      %v346 = vld [vmem:[%s287 + $0xe0] sm:$0xff]
      %v347 = vld [vmem:[%s287 + $0xe8] sm:$0x1]
      %v348 = vld [vmem:[%s287 + $0xf0] sm:$0xff]
      %v349 = vld [vmem:[%s287 + $0xf8] sm:$0x1]
      %v350 = vld [vmem:[%s305] sm:$0xff]
      %v351 = vld [vmem:[%s305 + $0x8] sm:$0x1]
      %v352 = vld [vmem:[%s2] sm:$0xf]
      %vm353 = vcmask 31744
      %v355 = vsel %vm353, %v318, 0
      %v358 = vsel %vm353, %v322, 0
      %v361 = vsel %vm353, %v326, 0
      %v364 = vsel %vm353, %v330, 0
      %v367 = vsel %vm353, %v334, 0
      %v370 = vsel %vm353, %v338, 0
      %v373 = vsel %vm353, %v342, 0
      %v376 = vsel %vm353, %v346, 0
      %vm378 = vcmask 1043456
      %v380 = vsel %vm378, %v352, 0
      %382 = vmatprep.subr.mxu0 0.0
      %383 = vmatpush1.msra.mxu0 %v380
      %384 = vmatprep.subr.mxu0 0.0
      %385 = vmatpush1.msra.mxu0 0.0
      %386 = vmatprep.subr.mxu0 0.0
      %387 = vmatpush1.msra.mxu0 0.0
      %388 = vmatprep.subr.mxu0 0.0
      %389 = vmatpush1.msra.mxu0 0.0
      %390 = vmatprep.subr.mxu0 0.0
      %391 = vmatpush1.msra.mxu0 0.0
      %392 = vmatprep.subr.mxu0 0.0
      %393 = vmatpush1.msra.mxu0 0.0
      %394 = vmatprep.subr.mxu0 0.0
      %395 = vmatpush1.msra.mxu0 0.0
      %396 = vmatprep.subr.mxu0 0.0
      %397 = vmatpush1.msra.mxu0 0.0
      %398 = vmatprep.subr.mxu0 0.0
      %399 = vmatpush1.msra.mxu0 0.0
      %400 = vmatprep.subr.mxu0 0.0
      %401 = vmatpush1.msra.mxu0 0.0
      %402 = vmatprep.subr.mxu0 0.0
      %403 = vmatpush1.msra.mxu0 0.0
      %404 = vmatprep.subr.mxu0 0.0
      %405 = vmatpush1.msra.mxu0 0.0
      %406 = vmatprep.subr.mxu0 0.0
      %407 = vmatpush1.msra.mxu0 0.0
      %408 = vmatprep.subr.mxu0 0.0
      %409 = vmatpush1.msra.mxu0 0.0
      %410 = vmatprep.subr.mxu0 0.0
      %411 = vmatpush1.msra.mxu0 0.0
      %412 = vmatprep.subr.mxu0 0.0
      %413 = vmatpush1.msra.mxu0 0.0
      %414 = vmatprep.subr.mxu0 0.0
      %415 = vmatpush1.msra.mxu0 0.0
      %416 = vmatprep.subr.mxu0 0.0
      %417 = vmatpush1.msra.mxu0 0.0
      %418 = vmatprep.subr.mxu0 0.0
      %419 = vmatpush1.msra.mxu0 0.0
      %420 = vmatprep.subr.mxu0 0.0
      %421 = vmatpush1.msra.mxu0 0.0
      %422 = vmatprep.subr.mxu0 0.0
      %423 = vmatpush1.msra.mxu0 0.0
      %424 = vmatprep.subr.mxu0 0.0
      %425 = vmatpush1.msra.mxu0 0.0
      %426 = vmatprep.subr.mxu0 0.0
      %427 = vmatpush1.msra.mxu0 0.0
      %428 = vmatprep.subr.mxu0 0.0
      %429 = vmatpush1.msra.mxu0 0.0
      %430 = vmatprep.subr.mxu0 0.0
      %431 = vmatpush1.msra.mxu0 0.0
      %432 = vmatprep.subr.mxu0 0.0
      %433 = vmatpush1.msra.mxu0 0.0
      %434 = vmatprep.subr.mxu0 0.0
      %435 = vmatpush1.msra.mxu0 0.0
      %436 = vmatprep.subr.mxu0 0.0
      %437 = vmatpush1.msra.mxu0 0.0
      %438 = vmatprep.subr.mxu0 0.0
      %439 = vmatpush1.msra.mxu0 0.0
      %440 = vmatprep.subr.mxu0 0.0
      %441 = vmatpush1.msra.mxu0 0.0
      %442 = vmatprep.subr.mxu0 0.0
      %443 = vmatpush1.msra.mxu0 0.0
      %444 = vmatprep.subr.mxu0 0.0
      %445 = vmatpush1.msra.mxu0 0.0
      %446 = vmatprep.mubr.f32.mxu0 0.0
      %447 = vmatmul.mubr.f32.gmra.mrb[0].mxu0 %v355
      %v448 = vpop.f32.mrb[0].mxu0
      %v449 = vadd.f32 0.0, %v448
      %v450 = vpop.f32.mrb[0].mxu0
      %451 = vmatprep.mubr.f32.mxu0 0.0
      %452 = vmatmul.mubr.f32.gmra.mrb[0].mxu0 %v358
      %v453 = vpop.f32.mrb[0].mxu0
      %v454 = vadd.f32 0.0, %v453
      %v455 = vpop.f32.mrb[0].mxu0
      %456 = vmatprep.mubr.f32.mxu0 0.0
      %457 = vmatmul.mubr.f32.gmra.mrb[0].mxu0 %v361
      %v458 = vpop.f32.mrb[0].mxu0
      %v459 = vadd.f32 0.0, %v458
      %v460 = vpop.f32.mrb[0].mxu0
      %461 = vmatprep.mubr.f32.mxu0 0.0
      %462 = vmatmul.mubr.f32.gmra.mrb[0].mxu0 %v364
      %v463 = vpop.f32.mrb[0].mxu0
      %v464 = vadd.f32 0.0, %v463
      %v465 = vpop.f32.mrb[0].mxu0
      %466 = vmatprep.mubr.f32.mxu0 0.0
      %467 = vmatmul.mubr.f32.gmra.mrb[0].mxu0 %v367
      %v468 = vpop.f32.mrb[0].mxu0
      %v469 = vadd.f32 0.0, %v468
      %v470 = vpop.f32.mrb[0].mxu0
      %471 = vmatprep.mubr.f32.mxu0 0.0
      %472 = vmatmul.mubr.f32.gmra.mrb[0].mxu0 %v370
      %v473 = vpop.f32.mrb[0].mxu0
      %v474 = vadd.f32 0.0, %v473
      %v475 = vpop.f32.mrb[0].mxu0
      %476 = vmatprep.mubr.f32.mxu0 0.0
      %477 = vmatmul.mubr.f32.gmra.mrb[0].mxu0 %v373
      %v478 = vpop.f32.mrb[0].mxu0
      %v479 = vadd.f32 0.0, %v478
      %v480 = vpop.f32.mrb[0].mxu0
      %481 = vmatprep.mubr.f32.mxu0 0.0
      %482 = vmatmul.mubr.f32.gmra.mrb[0].mxu0 %v376
      %v483 = vpop.f32.mrb[0].mxu0
      %v484 = vadd.f32 0.0, %v483
      %v485 = vpop.f32.mrb[0].mxu0
      %486 = vdwg.mxu0
      %487 = vst.msk [vmem:[#allocation2] sm:$0xff] %vm353, %v449
      %488 = vst.msk [vmem:[#allocation2 + $0x8] sm:$0xff] %vm353, %v454
      %489 = vst.msk [vmem:[#allocation2 + $0x10] sm:$0xff] %vm353, %v459
      %490 = vst.msk [vmem:[#allocation2 + $0x18] sm:$0xff] %vm353, %v464
      %491 = vst.msk [vmem:[#allocation2 + $0x20] sm:$0xff] %vm353, %v469
      %492 = vst.msk [vmem:[#allocation2 + $0x28] sm:$0xff] %vm353, %v474
      %493 = vst.msk [vmem:[#allocation2 + $0x30] sm:$0xff] %vm353, %v479
      %494 = vst.msk [vmem:[#allocation2 + $0x38] sm:$0xff] %vm353, %v484
      %s495 = scalar_lea.vmem %s2, 4
      %v496 = vld [vmem:[%s495] sm:$0xf]
      %497 = vrot.lane.b32.xlu0 %v318, 124
      %v498 = vpop.permute.xlu0 %497
      %499 = vrot.lane.b32.xlu0 %v322, 124
      %v500 = vpop.permute.xlu0 %499
      %501 = vrot.lane.b32.xlu0 %v326, 124
      %v502 = vpop.permute.xlu0 %501
      %503 = vrot.lane.b32.xlu0 %v330, 124
      %v504 = vpop.permute.xlu0 %503
      %505 = vrot.lane.b32.xlu0 %v334, 124
      %v506 = vpop.permute.xlu0 %505
      %507 = vrot.lane.b32.xlu0 %v338, 124
      %v508 = vpop.permute.xlu0 %507
      %509 = vrot.lane.b32.xlu0 %v342, 124
      %v510 = vpop.permute.xlu0 %509
      %511 = vrot.lane.b32.xlu0 %v346, 124
      %v512 = vpop.permute.xlu0 %511
      %v513 = vsel %vm353, %v498, 0
      %v515 = vsel %vm353, %v500, 0
      %v517 = vsel %vm353, %v502, 0
      %v519 = vsel %vm353, %v504, 0
      %v521 = vsel %vm353, %v506, 0
      %v523 = vsel %vm353, %v508, 0
      %v525 = vsel %vm353, %v510, 0
      %v527 = vsel %vm353, %v512, 0
      %v530 = vsel %vm378, %v496, 0
      %532 = vmatprep.subr.mxu0 0.0
      %533 = vmatpush1.msra.mxu0 %v530
      %534 = vmatprep.subr.mxu0 0.0
      %535 = vmatpush1.msra.mxu0 0.0
      %536 = vmatprep.subr.mxu0 0.0
      %537 = vmatpush1.msra.mxu0 0.0
      %538 = vmatprep.subr.mxu0 0.0
      %539 = vmatpush1.msra.mxu0 0.0
      %540 = vmatprep.subr.mxu0 0.0
      %541 = vmatpush1.msra.mxu0 0.0
      %542 = vmatprep.subr.mxu0 0.0
      %543 = vmatpush1.msra.mxu0 0.0
      %544 = vmatprep.subr.mxu0 0.0
      %545 = vmatpush1.msra.mxu0 0.0
      %546 = vmatprep.subr.mxu0 0.0
      %547 = vmatpush1.msra.mxu0 0.0
      %548 = vmatprep.subr.mxu0 0.0
      %549 = vmatpush1.msra.mxu0 0.0
      %550 = vmatprep.subr.mxu0 0.0
      %551 = vmatpush1.msra.mxu0 0.0
      %552 = vmatprep.subr.mxu0 0.0
      %553 = vmatpush1.msra.mxu0 0.0
      %554 = vmatprep.subr.mxu0 0.0
      %555 = vmatpush1.msra.mxu0 0.0
      %556 = vmatprep.subr.mxu0 0.0
      %557 = vmatpush1.msra.mxu0 0.0
      %558 = vmatprep.subr.mxu0 0.0
      %559 = vmatpush1.msra.mxu0 0.0
      %560 = vmatprep.subr.mxu0 0.0
      %561 = vmatpush1.msra.mxu0 0.0
      %562 = vmatprep.subr.mxu0 0.0
      %563 = vmatpush1.msra.mxu0 0.0
      %564 = vmatprep.subr.mxu0 0.0
      %565 = vmatpush1.msra.mxu0 0.0
      %566 = vmatprep.subr.mxu0 0.0
      %567 = vmatpush1.msra.mxu0 0.0
      %568 = vmatprep.subr.mxu0 0.0
      %569 = vmatpush1.msra.mxu0 0.0
      %570 = vmatprep.subr.mxu0 0.0
      %571 = vmatpush1.msra.mxu0 0.0
      %572 = vmatprep.subr.mxu0 0.0
      %573 = vmatpush1.msra.mxu0 0.0
      %574 = vmatprep.subr.mxu0 0.0
      %575 = vmatpush1.msra.mxu0 0.0
      %576 = vmatprep.subr.mxu0 0.0
      %577 = vmatpush1.msra.mxu0 0.0
      %578 = vmatprep.subr.mxu0 0.0
      %579 = vmatpush1.msra.mxu0 0.0
      %580 = vmatprep.subr.mxu0 0.0
      %581 = vmatpush1.msra.mxu0 0.0
      %582 = vmatprep.subr.mxu0 0.0
      %583 = vmatpush1.msra.mxu0 0.0
      %584 = vmatprep.subr.mxu0 0.0
      %585 = vmatpush1.msra.mxu0 0.0
      %586 = vmatprep.subr.mxu0 0.0
      %587 = vmatpush1.msra.mxu0 0.0
      %588 = vmatprep.subr.mxu0 0.0
      %589 = vmatpush1.msra.mxu0 0.0
      %590 = vmatprep.subr.mxu0 0.0
      %591 = vmatpush1.msra.mxu0 0.0
      %592 = vmatprep.subr.mxu0 0.0
      %593 = vmatpush1.msra.mxu0 0.0
      %594 = vmatprep.subr.mxu0 0.0
      %595 = vmatpush1.msra.mxu0 0.0
      %596 = vmatprep.mubr.f32.mxu0 0.0
      %597 = vmatmul.mubr.f32.gmra.mrb[0].mxu0 %v513
      %v598 = vpop.f32.mrb[0].mxu0
      %v599 = vadd.f32 0.0, %v598
      %v600 = vpop.f32.mrb[0].mxu0
      %601 = vmatprep.mubr.f32.mxu0 0.0
      %602 = vmatmul.mubr.f32.gmra.mrb[0].mxu0 %v515
      %v603 = vpop.f32.mrb[0].mxu0
      %v604 = vadd.f32 0.0, %v603
      %v605 = vpop.f32.mrb[0].mxu0
      %606 = vmatprep.mubr.f32.mxu0 0.0
      %607 = vmatmul.mubr.f32.gmra.mrb[0].mxu0 %v517
      %v608 = vpop.f32.mrb[0].mxu0
      %v609 = vadd.f32 0.0, %v608
      %v610 = vpop.f32.mrb[0].mxu0
      %611 = vmatprep.mubr.f32.mxu0 0.0
      %612 = vmatmul.mubr.f32.gmra.mrb[0].mxu0 %v519
      %v613 = vpop.f32.mrb[0].mxu0
      %v614 = vadd.f32 0.0, %v613
      %v615 = vpop.f32.mrb[0].mxu0
      %616 = vmatprep.mubr.f32.mxu0 0.0
      %617 = vmatmul.mubr.f32.gmra.mrb[0].mxu0 %v521
      %v618 = vpop.f32.mrb[0].mxu0
      %v619 = vadd.f32 0.0, %v618
      %v620 = vpop.f32.mrb[0].mxu0
      %621 = vmatprep.mubr.f32.mxu0 0.0
      %622 = vmatmul.mubr.f32.gmra.mrb[0].mxu0 %v523
      %v623 = vpop.f32.mrb[0].mxu0
      %v624 = vadd.f32 0.0, %v623
      %v625 = vpop.f32.mrb[0].mxu0
      %626 = vmatprep.mubr.f32.mxu0 0.0
      %627 = vmatmul.mubr.f32.gmra.mrb[0].mxu0 %v525
      %v628 = vpop.f32.mrb[0].mxu0
      %v629 = vadd.f32 0.0, %v628
      %v630 = vpop.f32.mrb[0].mxu0
      %631 = vmatprep.mubr.f32.mxu0 0.0
      %632 = vmatmul.mubr.f32.gmra.mrb[0].mxu0 %v527
      %v633 = vpop.f32.mrb[0].mxu0
      %v634 = vadd.f32 0.0, %v633
      %v635 = vpop.f32.mrb[0].mxu0
      %636 = vdwg.mxu0
      %v637 = vld [vmem:[#allocation2] sm:$0xff]
      %v638 = vld [vmem:[#allocation2 + $0x8] sm:$0xff]
      %v639 = vld [vmem:[#allocation2 + $0x10] sm:$0xff]
      %v640 = vld [vmem:[#allocation2 + $0x18] sm:$0xff]
      %v641 = vld [vmem:[#allocation2 + $0x20] sm:$0xff]
      %v642 = vld [vmem:[#allocation2 + $0x28] sm:$0xff]
      %v643 = vld [vmem:[#allocation2 + $0x30] sm:$0xff]
      %v644 = vld [vmem:[#allocation2 + $0x38] sm:$0xff]
      %v645 = vadd.f32 %v637, %v599
      %v646 = vadd.f32 %v638, %v604
      %v647 = vadd.f32 %v639, %v609
      %v648 = vadd.f32 %v640, %v614
      %v649 = vadd.f32 %v641, %v619
      %v650 = vadd.f32 %v642, %v624
      %v651 = vadd.f32 %v643, %v629
      %v652 = vadd.f32 %v644, %v634
      %653 = vst.msk [vmem:[#allocation2] sm:$0xff] %vm353, %v645
      %654 = vst.msk [vmem:[#allocation2 + $0x8] sm:$0xff] %vm353, %v646
      %655 = vst.msk [vmem:[#allocation2 + $0x10] sm:$0xff] %vm353, %v647
      %656 = vst.msk [vmem:[#allocation2 + $0x18] sm:$0xff] %vm353, %v648
      %657 = vst.msk [vmem:[#allocation2 + $0x20] sm:$0xff] %vm353, %v649
      %658 = vst.msk [vmem:[#allocation2 + $0x28] sm:$0xff] %vm353, %v650
      %659 = vst.msk [vmem:[#allocation2 + $0x30] sm:$0xff] %vm353, %v651
      %660 = vst.msk [vmem:[#allocation2 + $0x38] sm:$0xff] %vm353, %v652
      %vm669 = vcmask 1046528
      %v670 = vrot.slane %v318, 1
      %v671 = vrot.slane %v319, 1
      %v672 = vsel %vm669, %v670, %v671
      %v673 = vrot.slane %v322, 1
      %v674 = vrot.slane %v323, 1
      %v675 = vsel %vm669, %v673, %v674
      %v676 = vrot.slane %v326, 1
      %v677 = vrot.slane %v327, 1
      %v678 = vsel %vm669, %v676, %v677
      %v679 = vrot.slane %v330, 1
      %v680 = vrot.slane %v331, 1
      %v681 = vsel %vm669, %v679, %v680
      %v682 = vrot.slane %v334, 1
      %v683 = vrot.slane %v335, 1
      %v684 = vsel %vm669, %v682, %v683
      %v685 = vrot.slane %v338, 1
      %v686 = vrot.slane %v339, 1
      %v687 = vsel %vm669, %v685, %v686
      %v688 = vrot.slane %v342, 1
      %v689 = vrot.slane %v343, 1
      %v690 = vsel %vm669, %v688, %v689
      %v691 = vrot.slane %v346, 1
      %v692 = vrot.slane %v347, 1
      %v693 = vsel %vm669, %v691, %v692
      %s694 = scalar_lea.vmem %s2, 8
      %v695 = vld [vmem:[%s694] sm:$0xf]
      %v696 = vsel %vm353, %v672, 0
      %v698 = vsel %vm353, %v675, 0
      %v700 = vsel %vm353, %v678, 0
      %v702 = vsel %vm353, %v681, 0
      %v704 = vsel %vm353, %v684, 0
      %v706 = vsel %vm353, %v687, 0
      %v708 = vsel %vm353, %v690, 0
      %v710 = vsel %vm353, %v693, 0
      %v713 = vsel %vm378, %v695, 0
      %715 = vmatprep.subr.mxu0 0.0
      %716 = vmatpush1.msra.mxu0 %v713
      %717 = vmatprep.subr.mxu0 0.0
      %718 = vmatpush1.msra.mxu0 0.0
      %719 = vmatprep.subr.mxu0 0.0
      %720 = vmatpush1.msra.mxu0 0.0
      %721 = vmatprep.subr.mxu0 0.0
      %722 = vmatpush1.msra.mxu0 0.0
      %723 = vmatprep.subr.mxu0 0.0
      %724 = vmatpush1.msra.mxu0 0.0
      %725 = vmatprep.subr.mxu0 0.0
      %726 = vmatpush1.msra.mxu0 0.0
      %727 = vmatprep.subr.mxu0 0.0
      %728 = vmatpush1.msra.mxu0 0.0
      %729 = vmatprep.subr.mxu0 0.0
      %730 = vmatpush1.msra.mxu0 0.0
      %731 = vmatprep.subr.mxu0 0.0
      %732 = vmatpush1.msra.mxu0 0.0
      %733 = vmatprep.subr.mxu0 0.0
      %734 = vmatpush1.msra.mxu0 0.0
      %735 = vmatprep.subr.mxu0 0.0
      %736 = vmatpush1.msra.mxu0 0.0
      %737 = vmatprep.subr.mxu0 0.0
      %738 = vmatpush1.msra.mxu0 0.0
      %739 = vmatprep.subr.mxu0 0.0
      %740 = vmatpush1.msra.mxu0 0.0
      %741 = vmatprep.subr.mxu0 0.0
      %742 = vmatpush1.msra.mxu0 0.0
      %743 = vmatprep.subr.mxu0 0.0
      %744 = vmatpush1.msra.mxu0 0.0
      %745 = vmatprep.subr.mxu0 0.0
      %746 = vmatpush1.msra.mxu0 0.0
      %747 = vmatprep.subr.mxu0 0.0
      %748 = vmatpush1.msra.mxu0 0.0
      %749 = vmatprep.subr.mxu0 0.0
      %750 = vmatpush1.msra.mxu0 0.0
      %751 = vmatprep.subr.mxu0 0.0
      %752 = vmatpush1.msra.mxu0 0.0
      %753 = vmatprep.subr.mxu0 0.0
      %754 = vmatpush1.msra.mxu0 0.0
      %755 = vmatprep.subr.mxu0 0.0
      %756 = vmatpush1.msra.mxu0 0.0
      %757 = vmatprep.subr.mxu0 0.0
      %758 = vmatpush1.msra.mxu0 0.0
      %759 = vmatprep.subr.mxu0 0.0
      %760 = vmatpush1.msra.mxu0 0.0
      %761 = vmatprep.subr.mxu0 0.0
      %762 = vmatpush1.msra.mxu0 0.0
      %763 = vmatprep.subr.mxu0 0.0
      %764 = vmatpush1.msra.mxu0 0.0
      %765 = vmatprep.subr.mxu0 0.0
      %766 = vmatpush1.msra.mxu0 0.0
      %767 = vmatprep.subr.mxu0 0.0
      %768 = vmatpush1.msra.mxu0 0.0
      %769 = vmatprep.subr.mxu0 0.0
      %770 = vmatpush1.msra.mxu0 0.0
      %771 = vmatprep.subr.mxu0 0.0
      %772 = vmatpush1.msra.mxu0 0.0
      %773 = vmatprep.subr.mxu0 0.0
      %774 = vmatpush1.msra.mxu0 0.0
      %775 = vmatprep.subr.mxu0 0.0
      %776 = vmatpush1.msra.mxu0 0.0
      %777 = vmatprep.subr.mxu0 0.0
      %778 = vmatpush1.msra.mxu0 0.0
      %779 = vmatprep.mubr.f32.mxu0 0.0
      %780 = vmatmul.mubr.f32.gmra.mrb[0].mxu0 %v696
      %v781 = vpop.f32.mrb[0].mxu0
      %v782 = vadd.f32 0.0, %v781
      %v783 = vpop.f32.mrb[0].mxu0
      %784 = vmatprep.mubr.f32.mxu0 0.0
      %785 = vmatmul.mubr.f32.gmra.mrb[0].mxu0 %v698
      %v786 = vpop.f32.mrb[0].mxu0
      %v787 = vadd.f32 0.0, %v786
      %v788 = vpop.f32.mrb[0].mxu0
      %789 = vmatprep.mubr.f32.mxu0 0.0
      %790 = vmatmul.mubr.f32.gmra.mrb[0].mxu0 %v700
      %v791 = vpop.f32.mrb[0].mxu0
      %v792 = vadd.f32 0.0, %v791
      %v793 = vpop.f32.mrb[0].mxu0
      %794 = vmatprep.mubr.f32.mxu0 0.0
      %795 = vmatmul.mubr.f32.gmra.mrb[0].mxu0 %v702
      %v796 = vpop.f32.mrb[0].mxu0
      %v797 = vadd.f32 0.0, %v796
      %v798 = vpop.f32.mrb[0].mxu0
      %799 = vmatprep.mubr.f32.mxu0 0.0
      %800 = vmatmul.mubr.f32.gmra.mrb[0].mxu0 %v704
      %v801 = vpop.f32.mrb[0].mxu0
      %v802 = vadd.f32 0.0, %v801
      %v803 = vpop.f32.mrb[0].mxu0
      %804 = vmatprep.mubr.f32.mxu0 0.0
      %805 = vmatmul.mubr.f32.gmra.mrb[0].mxu0 %v706
      %v806 = vpop.f32.mrb[0].mxu0
      %v807 = vadd.f32 0.0, %v806
      %v808 = vpop.f32.mrb[0].mxu0
      %809 = vmatprep.mubr.f32.mxu0 0.0
      %810 = vmatmul.mubr.f32.gmra.mrb[0].mxu0 %v708
      %v811 = vpop.f32.mrb[0].mxu0
      %v812 = vadd.f32 0.0, %v811
      %v813 = vpop.f32.mrb[0].mxu0
      %814 = vmatprep.mubr.f32.mxu0 0.0
      %815 = vmatmul.mubr.f32.gmra.mrb[0].mxu0 %v710
      %v816 = vpop.f32.mrb[0].mxu0
      %v817 = vadd.f32 0.0, %v816
      %v818 = vpop.f32.mrb[0].mxu0
      %819 = vdwg.mxu0
      %v820 = vld [vmem:[#allocation2] sm:$0xff]
      %v821 = vld [vmem:[#allocation2 + $0x8] sm:$0xff]
      %v822 = vld [vmem:[#allocation2 + $0x10] sm:$0xff]
      %v823 = vld [vmem:[#allocation2 + $0x18] sm:$0xff]
      %v824 = vld [vmem:[#allocation2 + $0x20] sm:$0xff]
      %v825 = vld [vmem:[#allocation2 + $0x28] sm:$0xff]
      %v826 = vld [vmem:[#allocation2 + $0x30] sm:$0xff]
      %v827 = vld [vmem:[#allocation2 + $0x38] sm:$0xff]
      %v828 = vadd.f32 %v820, %v782
      %v829 = vadd.f32 %v821, %v787
      %v830 = vadd.f32 %v822, %v792
      %v831 = vadd.f32 %v823, %v797
      %v832 = vadd.f32 %v824, %v802
      %v833 = vadd.f32 %v825, %v807
      %v834 = vadd.f32 %v826, %v812
      %v835 = vadd.f32 %v827, %v817
      %836 = vst.msk [vmem:[#allocation2] sm:$0xff] %vm353, %v828
      %837 = vst.msk [vmem:[#allocation2 + $0x8] sm:$0xff] %vm353, %v829
      %838 = vst.msk [vmem:[#allocation2 + $0x10] sm:$0xff] %vm353, %v830
      %839 = vst.msk [vmem:[#allocation2 + $0x18] sm:$0xff] %vm353, %v831
      %840 = vst.msk [vmem:[#allocation2 + $0x20] sm:$0xff] %vm353, %v832
      %841 = vst.msk [vmem:[#allocation2 + $0x28] sm:$0xff] %vm353, %v833
      %842 = vst.msk [vmem:[#allocation2 + $0x30] sm:$0xff] %vm353, %v834
      %843 = vst.msk [vmem:[#allocation2 + $0x38] sm:$0xff] %vm353, %v835
      %s844 = scalar_lea.vmem %s2, 12
      %v845 = vld [vmem:[%s844] sm:$0xf]
      %v847 = vsel %vm353, %v320, 0
      %v850 = vsel %vm353, %v324, 0
      %v853 = vsel %vm353, %v328, 0
      %v856 = vsel %vm353, %v332, 0
      %v859 = vsel %vm353, %v336, 0
      %v862 = vsel %vm353, %v340, 0
      %v865 = vsel %vm353, %v344, 0
      %v868 = vsel %vm353, %v348, 0
      %v871 = vsel %vm378, %v845, 0
      %873 = vmatprep.subr.mxu0 0.0
      %874 = vmatpush1.msra.mxu0 %v871
      %875 = vmatprep.subr.mxu0 0.0
      %876 = vmatpush1.msra.mxu0 0.0
      %877 = vmatprep.subr.mxu0 0.0
      %878 = vmatpush1.msra.mxu0 0.0
      %879 = vmatprep.subr.mxu0 0.0
      %880 = vmatpush1.msra.mxu0 0.0
      %881 = vmatprep.subr.mxu0 0.0
      %882 = vmatpush1.msra.mxu0 0.0
      %883 = vmatprep.subr.mxu0 0.0
      %884 = vmatpush1.msra.mxu0 0.0
      %885 = vmatprep.subr.mxu0 0.0
      %886 = vmatpush1.msra.mxu0 0.0
      %887 = vmatprep.subr.mxu0 0.0
      %888 = vmatpush1.msra.mxu0 0.0
      %889 = vmatprep.subr.mxu0 0.0
      %890 = vmatpush1.msra.mxu0 0.0
      %891 = vmatprep.subr.mxu0 0.0
      %892 = vmatpush1.msra.mxu0 0.0
      %893 = vmatprep.subr.mxu0 0.0
      %894 = vmatpush1.msra.mxu0 0.0
      %895 = vmatprep.subr.mxu0 0.0
      %896 = vmatpush1.msra.mxu0 0.0
      %897 = vmatprep.subr.mxu0 0.0
      %898 = vmatpush1.msra.mxu0 0.0
      %899 = vmatprep.subr.mxu0 0.0
      %900 = vmatpush1.msra.mxu0 0.0
      %901 = vmatprep.subr.mxu0 0.0
      %902 = vmatpush1.msra.mxu0 0.0
      %903 = vmatprep.subr.mxu0 0.0
      %904 = vmatpush1.msra.mxu0 0.0
      %905 = vmatprep.subr.mxu0 0.0
      %906 = vmatpush1.msra.mxu0 0.0
      %907 = vmatprep.subr.mxu0 0.0
      %908 = vmatpush1.msra.mxu0 0.0
      %909 = vmatprep.subr.mxu0 0.0
      %910 = vmatpush1.msra.mxu0 0.0
      %911 = vmatprep.subr.mxu0 0.0
      %912 = vmatpush1.msra.mxu0 0.0
      %913 = vmatprep.subr.mxu0 0.0
      %914 = vmatpush1.msra.mxu0 0.0
      %915 = vmatprep.subr.mxu0 0.0
      %916 = vmatpush1.msra.mxu0 0.0
      %917 = vmatprep.subr.mxu0 0.0
      %918 = vmatpush1.msra.mxu0 0.0
      %919 = vmatprep.subr.mxu0 0.0
      %920 = vmatpush1.msra.mxu0 0.0
      %921 = vmatprep.subr.mxu0 0.0
      %922 = vmatpush1.msra.mxu0 0.0
      %923 = vmatprep.subr.mxu0 0.0
      %924 = vmatpush1.msra.mxu0 0.0
      %925 = vmatprep.subr.mxu0 0.0
      %926 = vmatpush1.msra.mxu0 0.0
      %927 = vmatprep.subr.mxu0 0.0
      %928 = vmatpush1.msra.mxu0 0.0
      %929 = vmatprep.subr.mxu0 0.0
      %930 = vmatpush1.msra.mxu0 0.0
      %931 = vmatprep.subr.mxu0 0.0
      %932 = vmatpush1.msra.mxu0 0.0
      %933 = vmatprep.subr.mxu0 0.0
      %934 = vmatpush1.msra.mxu0 0.0
      %935 = vmatprep.subr.mxu0 0.0
      %936 = vmatpush1.msra.mxu0 0.0
      %937 = vmatprep.mubr.f32.mxu0 0.0
      %938 = vmatmul.mubr.f32.gmra.mrb[0].mxu0 %v847
      %v939 = vpop.f32.mrb[0].mxu0
      %v940 = vadd.f32 0.0, %v939
      %v941 = vpop.f32.mrb[0].mxu0
      %942 = vmatprep.mubr.f32.mxu0 0.0
      %943 = vmatmul.mubr.f32.gmra.mrb[0].mxu0 %v850
      %v944 = vpop.f32.mrb[0].mxu0
      %v945 = vadd.f32 0.0, %v944
      %v946 = vpop.f32.mrb[0].mxu0
      %947 = vmatprep.mubr.f32.mxu0 0.0
      %948 = vmatmul.mubr.f32.gmra.mrb[0].mxu0 %v853
      %v949 = vpop.f32.mrb[0].mxu0
      %v950 = vadd.f32 0.0, %v949
      %v951 = vpop.f32.mrb[0].mxu0
      %952 = vmatprep.mubr.f32.mxu0 0.0
      %953 = vmatmul.mubr.f32.gmra.mrb[0].mxu0 %v856
      %v954 = vpop.f32.mrb[0].mxu0
      %v955 = vadd.f32 0.0, %v954
      %v956 = vpop.f32.mrb[0].mxu0
      %957 = vmatprep.mubr.f32.mxu0 0.0
      %958 = vmatmul.mubr.f32.gmra.mrb[0].mxu0 %v859
      %v959 = vpop.f32.mrb[0].mxu0
      %v960 = vadd.f32 0.0, %v959
      %v961 = vpop.f32.mrb[0].mxu0
      %962 = vmatprep.mubr.f32.mxu0 0.0
      %963 = vmatmul.mubr.f32.gmra.mrb[0].mxu0 %v862
      %v964 = vpop.f32.mrb[0].mxu0
      %v965 = vadd.f32 0.0, %v964
      %v966 = vpop.f32.mrb[0].mxu0
      %967 = vmatprep.mubr.f32.mxu0 0.0
      %968 = vmatmul.mubr.f32.gmra.mrb[0].mxu0 %v865
      %v969 = vpop.f32.mrb[0].mxu0
      %v970 = vadd.f32 0.0, %v969
      %v971 = vpop.f32.mrb[0].mxu0
      %972 = vmatprep.mubr.f32.mxu0 0.0
      %973 = vmatmul.mubr.f32.gmra.mrb[0].mxu0 %v868
      %v974 = vpop.f32.mrb[0].mxu0
      %v975 = vadd.f32 0.0, %v974
      %v976 = vpop.f32.mrb[0].mxu0
      %977 = vdwg.mxu0
      %v978 = vld [vmem:[#allocation2] sm:$0xff]
      %v979 = vld [vmem:[#allocation2 + $0x8] sm:$0xff]
      %v980 = vld [vmem:[#allocation2 + $0x10] sm:$0xff]
      %v981 = vld [vmem:[#allocation2 + $0x18] sm:$0xff]
      %v982 = vld [vmem:[#allocation2 + $0x20] sm:$0xff]
      %v983 = vld [vmem:[#allocation2 + $0x28] sm:$0xff]
      %v984 = vld [vmem:[#allocation2 + $0x30] sm:$0xff]
      %v985 = vld [vmem:[#allocation2 + $0x38] sm:$0xff]
      %v986 = vadd.f32 %v978, %v940
      %v987 = vadd.f32 %v979, %v945
      %v988 = vadd.f32 %v980, %v950
      %v989 = vadd.f32 %v981, %v955
      %v990 = vadd.f32 %v982, %v960
      %v991 = vadd.f32 %v983, %v965
      %v992 = vadd.f32 %v984, %v970
      %v993 = vadd.f32 %v985, %v975
      %994 = vst.msk [vmem:[#allocation2] sm:$0xff] %vm353, %v986
      %995 = vst.msk [vmem:[#allocation2 + $0x8] sm:$0xff] %vm353, %v987
      %996 = vst.msk [vmem:[#allocation2 + $0x10] sm:$0xff] %vm353, %v988
      %997 = vst.msk [vmem:[#allocation2 + $0x18] sm:$0xff] %vm353, %v989
      %998 = vst.msk [vmem:[#allocation2 + $0x20] sm:$0xff] %vm353, %v990
      %999 = vst.msk [vmem:[#allocation2 + $0x28] sm:$0xff] %vm353, %v991
      %1000 = vst.msk [vmem:[#allocation2 + $0x30] sm:$0xff] %vm353, %v992
      %1001 = vst.msk [vmem:[#allocation2 + $0x38] sm:$0xff] %vm353, %v993
      %s1002 = scalar_lea.vmem %s2, 16
      %v1003 = vld [vmem:[%s1002] sm:$0xf]
      %1004 = vrot.lane.b32.xlu0 %v320, 124
      %v1005 = vpop.permute.xlu0 %1004
      %1006 = vrot.lane.b32.xlu0 %v324, 124
      %v1007 = vpop.permute.xlu0 %1006
      %1008 = vrot.lane.b32.xlu0 %v328, 124
      %v1009 = vpop.permute.xlu0 %1008
      %1010 = vrot.lane.b32.xlu0 %v332, 124
      %v1011 = vpop.permute.xlu0 %1010
      %1012 = vrot.lane.b32.xlu0 %v336, 124
      %v1013 = vpop.permute.xlu0 %1012
      %1014 = vrot.lane.b32.xlu0 %v340, 124
      %v1015 = vpop.permute.xlu0 %1014
      %1016 = vrot.lane.b32.xlu0 %v344, 124
      %v1017 = vpop.permute.xlu0 %1016
      %1018 = vrot.lane.b32.xlu0 %v348, 124
      %v1019 = vpop.permute.xlu0 %1018
      %v1020 = vsel %vm353, %v1005, 0
      %v1022 = vsel %vm353, %v1007, 0
      %v1024 = vsel %vm353, %v1009, 0
      %v1026 = vsel %vm353, %v1011, 0
      %v1028 = vsel %vm353, %v1013, 0
      %v1030 = vsel %vm353, %v1015, 0
      %v1032 = vsel %vm353, %v1017, 0
      %v1034 = vsel %vm353, %v1019, 0
      %v1037 = vsel %vm378, %v1003, 0
      %1039 = vmatprep.subr.mxu0 0.0
      %1040 = vmatpush1.msra.mxu0 %v1037
      %1041 = vmatprep.subr.mxu0 0.0
      %1042 = vmatpush1.msra.mxu0 0.0
      %1043 = vmatprep.subr.mxu0 0.0
      %1044 = vmatpush1.msra.mxu0 0.0
      %1045 = vmatprep.subr.mxu0 0.0
      %1046 = vmatpush1.msra.mxu0 0.0
      %1047 = vmatprep.subr.mxu0 0.0
      %1048 = vmatpush1.msra.mxu0 0.0
      %1049 = vmatprep.subr.mxu0 0.0
      %1050 = vmatpush1.msra.mxu0 0.0
      %1051 = vmatprep.subr.mxu0 0.0
      %1052 = vmatpush1.msra.mxu0 0.0
      %1053 = vmatprep.subr.mxu0 0.0
      %1054 = vmatpush1.msra.mxu0 0.0
      %1055 = vmatprep.subr.mxu0 0.0
      %1056 = vmatpush1.msra.mxu0 0.0
      %1057 = vmatprep.subr.mxu0 0.0
      %1058 = vmatpush1.msra.mxu0 0.0
      %1059 = vmatprep.subr.mxu0 0.0
      %1060 = vmatpush1.msra.mxu0 0.0
      %1061 = vmatprep.subr.mxu0 0.0
      %1062 = vmatpush1.msra.mxu0 0.0
      %1063 = vmatprep.subr.mxu0 0.0
      %1064 = vmatpush1.msra.mxu0 0.0
      %1065 = vmatprep.subr.mxu0 0.0
      %1066 = vmatpush1.msra.mxu0 0.0
      %1067 = vmatprep.subr.mxu0 0.0
      %1068 = vmatpush1.msra.mxu0 0.0
      %1069 = vmatprep.subr.mxu0 0.0
      %1070 = vmatpush1.msra.mxu0 0.0
      %1071 = vmatprep.subr.mxu0 0.0
      %1072 = vmatpush1.msra.mxu0 0.0
      %1073 = vmatprep.subr.mxu0 0.0
      %1074 = vmatpush1.msra.mxu0 0.0
      %1075 = vmatprep.subr.mxu0 0.0
      %1076 = vmatpush1.msra.mxu0 0.0
      %1077 = vmatprep.subr.mxu0 0.0
      %1078 = vmatpush1.msra.mxu0 0.0
      %1079 = vmatprep.subr.mxu0 0.0
      %1080 = vmatpush1.msra.mxu0 0.0
      %1081 = vmatprep.subr.mxu0 0.0
      %1082 = vmatpush1.msra.mxu0 0.0
      %1083 = vmatprep.subr.mxu0 0.0
      %1084 = vmatpush1.msra.mxu0 0.0
      %1085 = vmatprep.subr.mxu0 0.0
      %1086 = vmatpush1.msra.mxu0 0.0
      %1087 = vmatprep.subr.mxu0 0.0
      %1088 = vmatpush1.msra.mxu0 0.0
      %1089 = vmatprep.subr.mxu0 0.0
      %1090 = vmatpush1.msra.mxu0 0.0
      %1091 = vmatprep.subr.mxu0 0.0
      %1092 = vmatpush1.msra.mxu0 0.0
      %1093 = vmatprep.subr.mxu0 0.0
      %1094 = vmatpush1.msra.mxu0 0.0
      %1095 = vmatprep.subr.mxu0 0.0
      %1096 = vmatpush1.msra.mxu0 0.0
      %1097 = vmatprep.subr.mxu0 0.0
      %1098 = vmatpush1.msra.mxu0 0.0
      %1099 = vmatprep.subr.mxu0 0.0
      %1100 = vmatpush1.msra.mxu0 0.0
      %1101 = vmatprep.subr.mxu0 0.0
      %1102 = vmatpush1.msra.mxu0 0.0
      %1103 = vmatprep.mubr.f32.mxu0 0.0
      %1104 = vmatmul.mubr.f32.gmra.mrb[0].mxu0 %v1020
      %v1105 = vpop.f32.mrb[0].mxu0
      %v1106 = vadd.f32 0.0, %v1105
      %v1107 = vpop.f32.mrb[0].mxu0
      %1108 = vmatprep.mubr.f32.mxu0 0.0
      %1109 = vmatmul.mubr.f32.gmra.mrb[0].mxu0 %v1022
      %v1110 = vpop.f32.mrb[0].mxu0
      %v1111 = vadd.f32 0.0, %v1110
      %v1112 = vpop.f32.mrb[0].mxu0
      %1113 = vmatprep.mubr.f32.mxu0 0.0
      %1114 = vmatmul.mubr.f32.gmra.mrb[0].mxu0 %v1024
      %v1115 = vpop.f32.mrb[0].mxu0
      %v1116 = vadd.f32 0.0, %v1115
      %v1117 = vpop.f32.mrb[0].mxu0
      %1118 = vmatprep.mubr.f32.mxu0 0.0
      %1119 = vmatmul.mubr.f32.gmra.mrb[0].mxu0 %v1026
      %v1120 = vpop.f32.mrb[0].mxu0
      %v1121 = vadd.f32 0.0, %v1120
      %v1122 = vpop.f32.mrb[0].mxu0
      %1123 = vmatprep.mubr.f32.mxu0 0.0
      %1124 = vmatmul.mubr.f32.gmra.mrb[0].mxu0 %v1028
      %v1125 = vpop.f32.mrb[0].mxu0
      %v1126 = vadd.f32 0.0, %v1125
      %v1127 = vpop.f32.mrb[0].mxu0
      %1128 = vmatprep.mubr.f32.mxu0 0.0
      %1129 = vmatmul.mubr.f32.gmra.mrb[0].mxu0 %v1030
      %v1130 = vpop.f32.mrb[0].mxu0
      %v1131 = vadd.f32 0.0, %v1130
      %v1132 = vpop.f32.mrb[0].mxu0
      %1133 = vmatprep.mubr.f32.mxu0 0.0
      %1134 = vmatmul.mubr.f32.gmra.mrb[0].mxu0 %v1032
      %v1135 = vpop.f32.mrb[0].mxu0
      %v1136 = vadd.f32 0.0, %v1135
      %v1137 = vpop.f32.mrb[0].mxu0
      %1138 = vmatprep.mubr.f32.mxu0 0.0
      %1139 = vmatmul.mubr.f32.gmra.mrb[0].mxu0 %v1034
      %v1140 = vpop.f32.mrb[0].mxu0
      %v1141 = vadd.f32 0.0, %v1140
      %v1142 = vpop.f32.mrb[0].mxu0
      %1143 = vdwg.mxu0
      %v1144 = vld [vmem:[#allocation2] sm:$0xff]
      %v1145 = vld [vmem:[#allocation2 + $0x8] sm:$0xff]
      %v1146 = vld [vmem:[#allocation2 + $0x10] sm:$0xff]
      %v1147 = vld [vmem:[#allocation2 + $0x18] sm:$0xff]
      %v1148 = vld [vmem:[#allocation2 + $0x20] sm:$0xff]
      %v1149 = vld [vmem:[#allocation2 + $0x28] sm:$0xff]
      %v1150 = vld [vmem:[#allocation2 + $0x30] sm:$0xff]
      %v1151 = vld [vmem:[#allocation2 + $0x38] sm:$0xff]
      %v1152 = vadd.f32 %v1144, %v1106
      %v1153 = vadd.f32 %v1145, %v1111
      %v1154 = vadd.f32 %v1146, %v1116
      %v1155 = vadd.f32 %v1147, %v1121
      %v1156 = vadd.f32 %v1148, %v1126
      %v1157 = vadd.f32 %v1149, %v1131
      %v1158 = vadd.f32 %v1150, %v1136
      %v1159 = vadd.f32 %v1151, %v1141
      %1160 = vst.msk [vmem:[#allocation2] sm:$0xff] %vm353, %v1152
      %1161 = vst.msk [vmem:[#allocation2 + $0x8] sm:$0xff] %vm353, %v1153
      %1162 = vst.msk [vmem:[#allocation2 + $0x10] sm:$0xff] %vm353, %v1154
      %1163 = vst.msk [vmem:[#allocation2 + $0x18] sm:$0xff] %vm353, %v1155
      %1164 = vst.msk [vmem:[#allocation2 + $0x20] sm:$0xff] %vm353, %v1156
      %1165 = vst.msk [vmem:[#allocation2 + $0x28] sm:$0xff] %vm353, %v1157
      %1166 = vst.msk [vmem:[#allocation2 + $0x30] sm:$0xff] %vm353, %v1158
      %1167 = vst.msk [vmem:[#allocation2 + $0x38] sm:$0xff] %vm353, %v1159
      %v1176 = vrot.slane %v320, 1
      %v1177 = vrot.slane %v321, 1
      %v1178 = vsel %vm669, %v1176, %v1177
      %v1179 = vrot.slane %v324, 1
      %v1180 = vrot.slane %v325, 1
      %v1181 = vsel %vm669, %v1179, %v1180
      %v1182 = vrot.slane %v328, 1
      %v1183 = vrot.slane %v329, 1
      %v1184 = vsel %vm669, %v1182, %v1183
      %v1185 = vrot.slane %v332, 1
      %v1186 = vrot.slane %v333, 1
      %v1187 = vsel %vm669, %v1185, %v1186
      %v1188 = vrot.slane %v336, 1
      %v1189 = vrot.slane %v337, 1
      %v1190 = vsel %vm669, %v1188, %v1189
      %v1191 = vrot.slane %v340, 1
      %v1192 = vrot.slane %v341, 1
      %v1193 = vsel %vm669, %v1191, %v1192
      %v1194 = vrot.slane %v344, 1
      %v1195 = vrot.slane %v345, 1
      %v1196 = vsel %vm669, %v1194, %v1195
      %v1197 = vrot.slane %v348, 1
      %v1198 = vrot.slane %v349, 1
      %v1199 = vsel %vm669, %v1197, %v1198
      %s1200 = scalar_lea.vmem %s2, 20
      %v1201 = vld [vmem:[%s1200] sm:$0xf]
      %v1202 = vsel %vm353, %v1178, 0
      %v1204 = vsel %vm353, %v1181, 0
      %v1206 = vsel %vm353, %v1184, 0
      %v1208 = vsel %vm353, %v1187, 0
      %v1210 = vsel %vm353, %v1190, 0
      %v1212 = vsel %vm353, %v1193, 0
      %v1214 = vsel %vm353, %v1196, 0
      %v1216 = vsel %vm353, %v1199, 0
      %v1219 = vsel %vm378, %v1201, 0
      %1221 = vmatprep.subr.mxu0 0.0
      %1222 = vmatpush1.msra.mxu0 %v1219
      %1223 = vmatprep.subr.mxu0 0.0
      %1224 = vmatpush1.msra.mxu0 0.0
      %1225 = vmatprep.subr.mxu0 0.0
      %1226 = vmatpush1.msra.mxu0 0.0
      %1227 = vmatprep.subr.mxu0 0.0
      %1228 = vmatpush1.msra.mxu0 0.0
      %1229 = vmatprep.subr.mxu0 0.0
      %1230 = vmatpush1.msra.mxu0 0.0
      %1231 = vmatprep.subr.mxu0 0.0
      %1232 = vmatpush1.msra.mxu0 0.0
      %1233 = vmatprep.subr.mxu0 0.0
      %1234 = vmatpush1.msra.mxu0 0.0
      %1235 = vmatprep.subr.mxu0 0.0
      %1236 = vmatpush1.msra.mxu0 0.0
      %1237 = vmatprep.subr.mxu0 0.0
      %1238 = vmatpush1.msra.mxu0 0.0
      %1239 = vmatprep.subr.mxu0 0.0
      %1240 = vmatpush1.msra.mxu0 0.0
      %1241 = vmatprep.subr.mxu0 0.0
      %1242 = vmatpush1.msra.mxu0 0.0
      %1243 = vmatprep.subr.mxu0 0.0
      %1244 = vmatpush1.msra.mxu0 0.0
      %1245 = vmatprep.subr.mxu0 0.0
      %1246 = vmatpush1.msra.mxu0 0.0
      %1247 = vmatprep.subr.mxu0 0.0
      %1248 = vmatpush1.msra.mxu0 0.0
      %1249 = vmatprep.subr.mxu0 0.0
      %1250 = vmatpush1.msra.mxu0 0.0
      %1251 = vmatprep.subr.mxu0 0.0
      %1252 = vmatpush1.msra.mxu0 0.0
      %1253 = vmatprep.subr.mxu0 0.0
      %1254 = vmatpush1.msra.mxu0 0.0
      %1255 = vmatprep.subr.mxu0 0.0
      %1256 = vmatpush1.msra.mxu0 0.0
      %1257 = vmatprep.subr.mxu0 0.0
      %1258 = vmatpush1.msra.mxu0 0.0
      %1259 = vmatprep.subr.mxu0 0.0
      %1260 = vmatpush1.msra.mxu0 0.0
      %1261 = vmatprep.subr.mxu0 0.0
      %1262 = vmatpush1.msra.mxu0 0.0
      %1263 = vmatprep.subr.mxu0 0.0
      %1264 = vmatpush1.msra.mxu0 0.0
      %1265 = vmatprep.subr.mxu0 0.0
      %1266 = vmatpush1.msra.mxu0 0.0
      %1267 = vmatprep.subr.mxu0 0.0
      %1268 = vmatpush1.msra.mxu0 0.0
      %1269 = vmatprep.subr.mxu0 0.0
      %1270 = vmatpush1.msra.mxu0 0.0
      %1271 = vmatprep.subr.mxu0 0.0
      %1272 = vmatpush1.msra.mxu0 0.0
      %1273 = vmatprep.subr.mxu0 0.0
      %1274 = vmatpush1.msra.mxu0 0.0
      %1275 = vmatprep.subr.mxu0 0.0
      %1276 = vmatpush1.msra.mxu0 0.0
      %1277 = vmatprep.subr.mxu0 0.0
      %1278 = vmatpush1.msra.mxu0 0.0
      %1279 = vmatprep.subr.mxu0 0.0
      %1280 = vmatpush1.msra.mxu0 0.0
      %1281 = vmatprep.subr.mxu0 0.0
      %1282 = vmatpush1.msra.mxu0 0.0
      %1283 = vmatprep.subr.mxu0 0.0
      %1284 = vmatpush1.msra.mxu0 0.0
      %1285 = vmatprep.mubr.f32.mxu0 0.0
      %1286 = vmatmul.mubr.f32.gmra.mrb[0].mxu0 %v1202
      %v1287 = vpop.f32.mrb[0].mxu0
      %v1288 = vadd.f32 0.0, %v1287
      %v1289 = vpop.f32.mrb[0].mxu0
      %1290 = vmatprep.mubr.f32.mxu0 0.0
      %1291 = vmatmul.mubr.f32.gmra.mrb[0].mxu0 %v1204
      %v1292 = vpop.f32.mrb[0].mxu0
      %v1293 = vadd.f32 0.0, %v1292
      %v1294 = vpop.f32.mrb[0].mxu0
      %1295 = vmatprep.mubr.f32.mxu0 0.0
      %1296 = vmatmul.mubr.f32.gmra.mrb[0].mxu0 %v1206
      %v1297 = vpop.f32.mrb[0].mxu0
      %v1298 = vadd.f32 0.0, %v1297
      %v1299 = vpop.f32.mrb[0].mxu0
      %1300 = vmatprep.mubr.f32.mxu0 0.0
      %1301 = vmatmul.mubr.f32.gmra.mrb[0].mxu0 %v1208
      %v1302 = vpop.f32.mrb[0].mxu0
      %v1303 = vadd.f32 0.0, %v1302
      %v1304 = vpop.f32.mrb[0].mxu0
      %1305 = vmatprep.mubr.f32.mxu0 0.0
      %1306 = vmatmul.mubr.f32.gmra.mrb[0].mxu0 %v1210
      %v1307 = vpop.f32.mrb[0].mxu0
      %v1308 = vadd.f32 0.0, %v1307
      %v1309 = vpop.f32.mrb[0].mxu0
      %1310 = vmatprep.mubr.f32.mxu0 0.0
      %1311 = vmatmul.mubr.f32.gmra.mrb[0].mxu0 %v1212
      %v1312 = vpop.f32.mrb[0].mxu0
      %v1313 = vadd.f32 0.0, %v1312
      %v1314 = vpop.f32.mrb[0].mxu0
      %1315 = vmatprep.mubr.f32.mxu0 0.0
      %1316 = vmatmul.mubr.f32.gmra.mrb[0].mxu0 %v1214
      %v1317 = vpop.f32.mrb[0].mxu0
      %v1318 = vadd.f32 0.0, %v1317
      %v1319 = vpop.f32.mrb[0].mxu0
      %1320 = vmatprep.mubr.f32.mxu0 0.0
      %1321 = vmatmul.mubr.f32.gmra.mrb[0].mxu0 %v1216
      %v1322 = vpop.f32.mrb[0].mxu0
      %v1323 = vadd.f32 0.0, %v1322
      %v1324 = vpop.f32.mrb[0].mxu0
      %1325 = vdwg.mxu0
      %v1326 = vld [vmem:[#allocation2] sm:$0xff]
      %v1327 = vld [vmem:[#allocation2 + $0x8] sm:$0xff]
      %v1328 = vld [vmem:[#allocation2 + $0x10] sm:$0xff]
      %v1329 = vld [vmem:[#allocation2 + $0x18] sm:$0xff]
      %v1330 = vld [vmem:[#allocation2 + $0x20] sm:$0xff]
      %v1331 = vld [vmem:[#allocation2 + $0x28] sm:$0xff]
      %v1332 = vld [vmem:[#allocation2 + $0x30] sm:$0xff]
      %v1333 = vld [vmem:[#allocation2 + $0x38] sm:$0xff]
      %v1334 = vadd.f32 %v1326, %v1288
      %v1335 = vadd.f32 %v1327, %v1293
      %v1336 = vadd.f32 %v1328, %v1298
      %v1337 = vadd.f32 %v1329, %v1303
      %v1338 = vadd.f32 %v1330, %v1308
      %v1339 = vadd.f32 %v1331, %v1313
      %v1340 = vadd.f32 %v1332, %v1318
      %v1341 = vadd.f32 %v1333, %v1323
      %1342 = vst.msk [vmem:[#allocation2] sm:$0xff] %vm353, %v1334
      %1343 = vst.msk [vmem:[#allocation2 + $0x8] sm:$0xff] %vm353, %v1335
      %1344 = vst.msk [vmem:[#allocation2 + $0x10] sm:$0xff] %vm353, %v1336
      %1345 = vst.msk [vmem:[#allocation2 + $0x18] sm:$0xff] %vm353, %v1337
      %1346 = vst.msk [vmem:[#allocation2 + $0x20] sm:$0xff] %vm353, %v1338
      %1347 = vst.msk [vmem:[#allocation2 + $0x28] sm:$0xff] %vm353, %v1339
      %1348 = vst.msk [vmem:[#allocation2 + $0x30] sm:$0xff] %vm353, %v1340
      %1349 = vst.msk [vmem:[#allocation2 + $0x38] sm:$0xff] %vm353, %v1341
      %s1350 = scalar_lea.vmem %s2, 24
      %v1351 = vld [vmem:[%s1350] sm:$0xf]
      %v1353 = vsel %vm353, %v350, 0
      %v1356 = vsel %vm378, %v1351, 0
      %1358 = vmatprep.subr.mxu0 0.0
      %1359 = vmatpush1.msra.mxu0 %v1356
      %1360 = vmatprep.subr.mxu0 0.0
      %1361 = vmatpush1.msra.mxu0 0.0
      %1362 = vmatprep.subr.mxu0 0.0
      %1363 = vmatpush1.msra.mxu0 0.0
      %1364 = vmatprep.subr.mxu0 0.0
      %1365 = vmatpush1.msra.mxu0 0.0
      %1366 = vmatprep.subr.mxu0 0.0
      %1367 = vmatpush1.msra.mxu0 0.0
      %1368 = vmatprep.subr.mxu0 0.0
      %1369 = vmatpush1.msra.mxu0 0.0
      %1370 = vmatprep.subr.mxu0 0.0
      %1371 = vmatpush1.msra.mxu0 0.0
      %1372 = vmatprep.subr.mxu0 0.0
      %1373 = vmatpush1.msra.mxu0 0.0
      %1374 = vmatprep.subr.mxu0 0.0
      %1375 = vmatpush1.msra.mxu0 0.0
      %1376 = vmatprep.subr.mxu0 0.0
      %1377 = vmatpush1.msra.mxu0 0.0
      %1378 = vmatprep.subr.mxu0 0.0
      %1379 = vmatpush1.msra.mxu0 0.0
      %1380 = vmatprep.subr.mxu0 0.0
      %1381 = vmatpush1.msra.mxu0 0.0
      %1382 = vmatprep.subr.mxu0 0.0
      %1383 = vmatpush1.msra.mxu0 0.0
      %1384 = vmatprep.subr.mxu0 0.0
      %1385 = vmatpush1.msra.mxu0 0.0
      %1386 = vmatprep.subr.mxu0 0.0
      %1387 = vmatpush1.msra.mxu0 0.0
      %1388 = vmatprep.subr.mxu0 0.0
      %1389 = vmatpush1.msra.mxu0 0.0
      %1390 = vmatprep.subr.mxu0 0.0
      %1391 = vmatpush1.msra.mxu0 0.0
      %1392 = vmatprep.subr.mxu0 0.0
      %1393 = vmatpush1.msra.mxu0 0.0
      %1394 = vmatprep.subr.mxu0 0.0
      %1395 = vmatpush1.msra.mxu0 0.0
      %1396 = vmatprep.subr.mxu0 0.0
      %1397 = vmatpush1.msra.mxu0 0.0
      %1398 = vmatprep.subr.mxu0 0.0
      %1399 = vmatpush1.msra.mxu0 0.0
      %1400 = vmatprep.subr.mxu0 0.0
      %1401 = vmatpush1.msra.mxu0 0.0
      %1402 = vmatprep.subr.mxu0 0.0
      %1403 = vmatpush1.msra.mxu0 0.0
      %1404 = vmatprep.subr.mxu0 0.0
      %1405 = vmatpush1.msra.mxu0 0.0
      %1406 = vmatprep.subr.mxu0 0.0
      %1407 = vmatpush1.msra.mxu0 0.0
      %1408 = vmatprep.subr.mxu0 0.0
      %1409 = vmatpush1.msra.mxu0 0.0
      %1410 = vmatprep.subr.mxu0 0.0
      %1411 = vmatpush1.msra.mxu0 0.0
      %1412 = vmatprep.subr.mxu0 0.0
      %1413 = vmatpush1.msra.mxu0 0.0
      %1414 = vmatprep.subr.mxu0 0.0
      %1415 = vmatpush1.msra.mxu0 0.0
      %1416 = vmatprep.subr.mxu0 0.0
      %1417 = vmatpush1.msra.mxu0 0.0
      %1418 = vmatprep.subr.mxu0 0.0
      %1419 = vmatpush1.msra.mxu0 0.0
      %1420 = vmatprep.subr.mxu0 0.0
      %1421 = vmatpush1.msra.mxu0 0.0
      %1422 = vmatprep.mubr.f32.mxu0 0.0
      %1423 = vmatmul.mubr.f32.gmra.mrb[0].mxu0 %v358
      %v1424 = vpop.f32.mrb[0].mxu0
      %v1425 = vadd.f32 0.0, %v1424
      %v1426 = vpop.f32.mrb[0].mxu0
      %1427 = vmatprep.mubr.f32.mxu0 0.0
      %1428 = vmatmul.mubr.f32.gmra.mrb[0].mxu0 %v361
      %v1429 = vpop.f32.mrb[0].mxu0
      %v1430 = vadd.f32 0.0, %v1429
      %v1431 = vpop.f32.mrb[0].mxu0
      %1432 = vmatprep.mubr.f32.mxu0 0.0
      %1433 = vmatmul.mubr.f32.gmra.mrb[0].mxu0 %v364
      %v1434 = vpop.f32.mrb[0].mxu0
      %v1435 = vadd.f32 0.0, %v1434
      %v1436 = vpop.f32.mrb[0].mxu0
      %1437 = vmatprep.mubr.f32.mxu0 0.0
      %1438 = vmatmul.mubr.f32.gmra.mrb[0].mxu0 %v367
      %v1439 = vpop.f32.mrb[0].mxu0
      %v1440 = vadd.f32 0.0, %v1439
      %v1441 = vpop.f32.mrb[0].mxu0
      %1442 = vmatprep.mubr.f32.mxu0 0.0
      %1443 = vmatmul.mubr.f32.gmra.mrb[0].mxu0 %v370
      %v1444 = vpop.f32.mrb[0].mxu0
      %v1445 = vadd.f32 0.0, %v1444
      %v1446 = vpop.f32.mrb[0].mxu0
      %1447 = vmatprep.mubr.f32.mxu0 0.0
      %1448 = vmatmul.mubr.f32.gmra.mrb[0].mxu0 %v373
      %v1449 = vpop.f32.mrb[0].mxu0
      %v1450 = vadd.f32 0.0, %v1449
      %v1451 = vpop.f32.mrb[0].mxu0
      %1452 = vmatprep.mubr.f32.mxu0 0.0
      %1453 = vmatmul.mubr.f32.gmra.mrb[0].mxu0 %v376
      %v1454 = vpop.f32.mrb[0].mxu0
      %v1455 = vadd.f32 0.0, %v1454
      %v1456 = vpop.f32.mrb[0].mxu0
      %1457 = vmatprep.mubr.f32.mxu0 0.0
      %1458 = vmatmul.mubr.f32.gmra.mrb[0].mxu0 %v1353
      %v1459 = vpop.f32.mrb[0].mxu0
      %v1460 = vadd.f32 0.0, %v1459
      %v1461 = vpop.f32.mrb[0].mxu0
      %1462 = vdwg.mxu0
      %v1463 = vld [vmem:[#allocation2] sm:$0xff]
      %v1464 = vld [vmem:[#allocation2 + $0x8] sm:$0xff]
      %v1465 = vld [vmem:[#allocation2 + $0x10] sm:$0xff]
      %v1466 = vld [vmem:[#allocation2 + $0x18] sm:$0xff]
      %v1467 = vld [vmem:[#allocation2 + $0x20] sm:$0xff]
      %v1468 = vld [vmem:[#allocation2 + $0x28] sm:$0xff]
      %v1469 = vld [vmem:[#allocation2 + $0x30] sm:$0xff]
      %v1470 = vld [vmem:[#allocation2 + $0x38] sm:$0xff]
      %v1471 = vadd.f32 %v1463, %v1425
      %v1472 = vadd.f32 %v1464, %v1430
      %v1473 = vadd.f32 %v1465, %v1435
      %v1474 = vadd.f32 %v1466, %v1440
      %v1475 = vadd.f32 %v1467, %v1445
      %v1476 = vadd.f32 %v1468, %v1450
      %v1477 = vadd.f32 %v1469, %v1455
      %v1478 = vadd.f32 %v1470, %v1460
      %1479 = vst.msk [vmem:[#allocation2] sm:$0xff] %vm353, %v1471
      %1480 = vst.msk [vmem:[#allocation2 + $0x8] sm:$0xff] %vm353, %v1472
      %1481 = vst.msk [vmem:[#allocation2 + $0x10] sm:$0xff] %vm353, %v1473
      %1482 = vst.msk [vmem:[#allocation2 + $0x18] sm:$0xff] %vm353, %v1474
      %1483 = vst.msk [vmem:[#allocation2 + $0x20] sm:$0xff] %vm353, %v1475
      %1484 = vst.msk [vmem:[#allocation2 + $0x28] sm:$0xff] %vm353, %v1476
      %1485 = vst.msk [vmem:[#allocation2 + $0x30] sm:$0xff] %vm353, %v1477
      %1486 = vst.msk [vmem:[#allocation2 + $0x38] sm:$0xff] %vm353, %v1478
      %s1487 = scalar_lea.vmem %s2, 28
      %v1488 = vld [vmem:[%s1487] sm:$0xf]
      %1489 = vrot.lane.b32.xlu0 %v350, 124
      %v1490 = vpop.permute.xlu0 %1489
      %v1491 = vsel %vm353, %v1490, 0
      %v1494 = vsel %vm378, %v1488, 0
      %1496 = vmatprep.subr.mxu0 0.0
      %1497 = vmatpush1.msra.mxu0 %v1494
      %1498 = vmatprep.subr.mxu0 0.0
      %1499 = vmatpush1.msra.mxu0 0.0
      %1500 = vmatprep.subr.mxu0 0.0
      %1501 = vmatpush1.msra.mxu0 0.0
      %1502 = vmatprep.subr.mxu0 0.0
      %1503 = vmatpush1.msra.mxu0 0.0
      %1504 = vmatprep.subr.mxu0 0.0
      %1505 = vmatpush1.msra.mxu0 0.0
      %1506 = vmatprep.subr.mxu0 0.0
      %1507 = vmatpush1.msra.mxu0 0.0
      %1508 = vmatprep.subr.mxu0 0.0
      %1509 = vmatpush1.msra.mxu0 0.0
      %1510 = vmatprep.subr.mxu0 0.0
      %1511 = vmatpush1.msra.mxu0 0.0
      %1512 = vmatprep.subr.mxu0 0.0
      %1513 = vmatpush1.msra.mxu0 0.0
      %1514 = vmatprep.subr.mxu0 0.0
      %1515 = vmatpush1.msra.mxu0 0.0
      %1516 = vmatprep.subr.mxu0 0.0
      %1517 = vmatpush1.msra.mxu0 0.0
      %1518 = vmatprep.subr.mxu0 0.0
      %1519 = vmatpush1.msra.mxu0 0.0
      %1520 = vmatprep.subr.mxu0 0.0
      %1521 = vmatpush1.msra.mxu0 0.0
      %1522 = vmatprep.subr.mxu0 0.0
      %1523 = vmatpush1.msra.mxu0 0.0
      %1524 = vmatprep.subr.mxu0 0.0
      %1525 = vmatpush1.msra.mxu0 0.0
      %1526 = vmatprep.subr.mxu0 0.0
      %1527 = vmatpush1.msra.mxu0 0.0
      %1528 = vmatprep.subr.mxu0 0.0
      %1529 = vmatpush1.msra.mxu0 0.0
      %1530 = vmatprep.subr.mxu0 0.0
      %1531 = vmatpush1.msra.mxu0 0.0
      %1532 = vmatprep.subr.mxu0 0.0
      %1533 = vmatpush1.msra.mxu0 0.0
      %1534 = vmatprep.subr.mxu0 0.0
      %1535 = vmatpush1.msra.mxu0 0.0
      %1536 = vmatprep.subr.mxu0 0.0
      %1537 = vmatpush1.msra.mxu0 0.0
      %1538 = vmatprep.subr.mxu0 0.0
      %1539 = vmatpush1.msra.mxu0 0.0
      %1540 = vmatprep.subr.mxu0 0.0
      %1541 = vmatpush1.msra.mxu0 0.0
      %1542 = vmatprep.subr.mxu0 0.0
      %1543 = vmatpush1.msra.mxu0 0.0
      %1544 = vmatprep.subr.mxu0 0.0
      %1545 = vmatpush1.msra.mxu0 0.0
      %1546 = vmatprep.subr.mxu0 0.0
      %1547 = vmatpush1.msra.mxu0 0.0
      %1548 = vmatprep.subr.mxu0 0.0
      %1549 = vmatpush1.msra.mxu0 0.0
      %1550 = vmatprep.subr.mxu0 0.0
      %1551 = vmatpush1.msra.mxu0 0.0
      %1552 = vmatprep.subr.mxu0 0.0
      %1553 = vmatpush1.msra.mxu0 0.0
      %1554 = vmatprep.subr.mxu0 0.0
      %1555 = vmatpush1.msra.mxu0 0.0
      %1556 = vmatprep.subr.mxu0 0.0
      %1557 = vmatpush1.msra.mxu0 0.0
      %1558 = vmatprep.subr.mxu0 0.0
      %1559 = vmatpush1.msra.mxu0 0.0
      %1560 = vmatprep.mubr.f32.mxu0 0.0
      %1561 = vmatmul.mubr.f32.gmra.mrb[0].mxu0 %v515
      %v1562 = vpop.f32.mrb[0].mxu0
      %v1563 = vadd.f32 0.0, %v1562
      %v1564 = vpop.f32.mrb[0].mxu0
      %1565 = vmatprep.mubr.f32.mxu0 0.0
      %1566 = vmatmul.mubr.f32.gmra.mrb[0].mxu0 %v517
      %v1567 = vpop.f32.mrb[0].mxu0
      %v1568 = vadd.f32 0.0, %v1567
      %v1569 = vpop.f32.mrb[0].mxu0
      %1570 = vmatprep.mubr.f32.mxu0 0.0
      %1571 = vmatmul.mubr.f32.gmra.mrb[0].mxu0 %v519
      %v1572 = vpop.f32.mrb[0].mxu0
      %v1573 = vadd.f32 0.0, %v1572
      %v1574 = vpop.f32.mrb[0].mxu0
      %1575 = vmatprep.mubr.f32.mxu0 0.0
      %1576 = vmatmul.mubr.f32.gmra.mrb[0].mxu0 %v521
      %v1577 = vpop.f32.mrb[0].mxu0
      %v1578 = vadd.f32 0.0, %v1577
      %v1579 = vpop.f32.mrb[0].mxu0
      %1580 = vmatprep.mubr.f32.mxu0 0.0
      %1581 = vmatmul.mubr.f32.gmra.mrb[0].mxu0 %v523
      %v1582 = vpop.f32.mrb[0].mxu0
      %v1583 = vadd.f32 0.0, %v1582
      %v1584 = vpop.f32.mrb[0].mxu0
      %1585 = vmatprep.mubr.f32.mxu0 0.0
      %1586 = vmatmul.mubr.f32.gmra.mrb[0].mxu0 %v525
      %v1587 = vpop.f32.mrb[0].mxu0
      %v1588 = vadd.f32 0.0, %v1587
      %v1589 = vpop.f32.mrb[0].mxu0
      %1590 = vmatprep.mubr.f32.mxu0 0.0
      %1591 = vmatmul.mubr.f32.gmra.mrb[0].mxu0 %v527
      %v1592 = vpop.f32.mrb[0].mxu0
      %v1593 = vadd.f32 0.0, %v1592
      %v1594 = vpop.f32.mrb[0].mxu0
      %1595 = vmatprep.mubr.f32.mxu0 0.0
      %1596 = vmatmul.mubr.f32.gmra.mrb[0].mxu0 %v1491
      %v1597 = vpop.f32.mrb[0].mxu0
      %v1598 = vadd.f32 0.0, %v1597
      %v1599 = vpop.f32.mrb[0].mxu0
      %1600 = vdwg.mxu0
      %v1601 = vld [vmem:[#allocation2] sm:$0xff]
      %v1602 = vld [vmem:[#allocation2 + $0x8] sm:$0xff]
      %v1603 = vld [vmem:[#allocation2 + $0x10] sm:$0xff]
      %v1604 = vld [vmem:[#allocation2 + $0x18] sm:$0xff]
      %v1605 = vld [vmem:[#allocation2 + $0x20] sm:$0xff]
      %v1606 = vld [vmem:[#allocation2 + $0x28] sm:$0xff]
      %v1607 = vld [vmem:[#allocation2 + $0x30] sm:$0xff]
      %v1608 = vld [vmem:[#allocation2 + $0x38] sm:$0xff]
      %v1609 = vadd.f32 %v1601, %v1563
      %v1610 = vadd.f32 %v1602, %v1568
      %v1611 = vadd.f32 %v1603, %v1573
      %v1612 = vadd.f32 %v1604, %v1578
      %v1613 = vadd.f32 %v1605, %v1583
      %v1614 = vadd.f32 %v1606, %v1588
      %v1615 = vadd.f32 %v1607, %v1593
      %v1616 = vadd.f32 %v1608, %v1598
      %1617 = vst.msk [vmem:[#allocation2] sm:$0xff] %vm353, %v1609
      %1618 = vst.msk [vmem:[#allocation2 + $0x8] sm:$0xff] %vm353, %v1610
      %1619 = vst.msk [vmem:[#allocation2 + $0x10] sm:$0xff] %vm353, %v1611
      %1620 = vst.msk [vmem:[#allocation2 + $0x18] sm:$0xff] %vm353, %v1612
      %1621 = vst.msk [vmem:[#allocation2 + $0x20] sm:$0xff] %vm353, %v1613
      %1622 = vst.msk [vmem:[#allocation2 + $0x28] sm:$0xff] %vm353, %v1614
      %1623 = vst.msk [vmem:[#allocation2 + $0x30] sm:$0xff] %vm353, %v1615
      %1624 = vst.msk [vmem:[#allocation2 + $0x38] sm:$0xff] %vm353, %v1616
      %v1626 = vrot.slane %v350, 1
      %v1627 = vrot.slane %v351, 1
      %v1628 = vsel %vm669, %v1626, %v1627
      %s1629 = scalar_lea.vmem %s2, 32
      %v1630 = vld [vmem:[%s1629] sm:$0xf]
      %v1631 = vsel %vm353, %v1628, 0
      %v1634 = vsel %vm378, %v1630, 0
      %1636 = vmatprep.subr.mxu0 0.0
      %1637 = vmatpush1.msra.mxu0 %v1634
      %1638 = vmatprep.subr.mxu0 0.0
      %1639 = vmatpush1.msra.mxu0 0.0
      %1640 = vmatprep.subr.mxu0 0.0
      %1641 = vmatpush1.msra.mxu0 0.0
      %1642 = vmatprep.subr.mxu0 0.0
      %1643 = vmatpush1.msra.mxu0 0.0
      %1644 = vmatprep.subr.mxu0 0.0
      %1645 = vmatpush1.msra.mxu0 0.0
      %1646 = vmatprep.subr.mxu0 0.0
      %1647 = vmatpush1.msra.mxu0 0.0
      %1648 = vmatprep.subr.mxu0 0.0
      %1649 = vmatpush1.msra.mxu0 0.0
      %1650 = vmatprep.subr.mxu0 0.0
      %1651 = vmatpush1.msra.mxu0 0.0
      %1652 = vmatprep.subr.mxu0 0.0
      %1653 = vmatpush1.msra.mxu0 0.0
      %1654 = vmatprep.subr.mxu0 0.0
      %1655 = vmatpush1.msra.mxu0 0.0
      %1656 = vmatprep.subr.mxu0 0.0
      %1657 = vmatpush1.msra.mxu0 0.0
      %1658 = vmatprep.subr.mxu0 0.0
      %1659 = vmatpush1.msra.mxu0 0.0
      %1660 = vmatprep.subr.mxu0 0.0
      %1661 = vmatpush1.msra.mxu0 0.0
      %1662 = vmatprep.subr.mxu0 0.0
      %1663 = vmatpush1.msra.mxu0 0.0
      %1664 = vmatprep.subr.mxu0 0.0
      %1665 = vmatpush1.msra.mxu0 0.0
      %1666 = vmatprep.subr.mxu0 0.0
      %1667 = vmatpush1.msra.mxu0 0.0
      %1668 = vmatprep.subr.mxu0 0.0
      %1669 = vmatpush1.msra.mxu0 0.0
      %1670 = vmatprep.subr.mxu0 0.0
      %1671 = vmatpush1.msra.mxu0 0.0
      %1672 = vmatprep.subr.mxu0 0.0
      %1673 = vmatpush1.msra.mxu0 0.0
      %1674 = vmatprep.subr.mxu0 0.0
      %1675 = vmatpush1.msra.mxu0 0.0
      %1676 = vmatprep.subr.mxu0 0.0
      %1677 = vmatpush1.msra.mxu0 0.0
      %1678 = vmatprep.subr.mxu0 0.0
      %1679 = vmatpush1.msra.mxu0 0.0
      %1680 = vmatprep.subr.mxu0 0.0
      %1681 = vmatpush1.msra.mxu0 0.0
      %1682 = vmatprep.subr.mxu0 0.0
      %1683 = vmatpush1.msra.mxu0 0.0
      %1684 = vmatprep.subr.mxu0 0.0
      %1685 = vmatpush1.msra.mxu0 0.0
      %1686 = vmatprep.subr.mxu0 0.0
      %1687 = vmatpush1.msra.mxu0 0.0
      %1688 = vmatprep.subr.mxu0 0.0
      %1689 = vmatpush1.msra.mxu0 0.0
      %1690 = vmatprep.subr.mxu0 0.0
      %1691 = vmatpush1.msra.mxu0 0.0
      %1692 = vmatprep.subr.mxu0 0.0
      %1693 = vmatpush1.msra.mxu0 0.0
      %1694 = vmatprep.subr.mxu0 0.0
      %1695 = vmatpush1.msra.mxu0 0.0
      %1696 = vmatprep.subr.mxu0 0.0
      %1697 = vmatpush1.msra.mxu0 0.0
      %1698 = vmatprep.subr.mxu0 0.0
      %1699 = vmatpush1.msra.mxu0 0.0
      %1700 = vmatprep.mubr.f32.mxu0 0.0
      %1701 = vmatmul.mubr.f32.gmra.mrb[0].mxu0 %v698
      %v1702 = vpop.f32.mrb[0].mxu0
      %v1703 = vadd.f32 0.0, %v1702
      %v1704 = vpop.f32.mrb[0].mxu0
      %1705 = vmatprep.mubr.f32.mxu0 0.0
      %1706 = vmatmul.mubr.f32.gmra.mrb[0].mxu0 %v700
      %v1707 = vpop.f32.mrb[0].mxu0
      %v1708 = vadd.f32 0.0, %v1707
      %v1709 = vpop.f32.mrb[0].mxu0
      %1710 = vmatprep.mubr.f32.mxu0 0.0
      %1711 = vmatmul.mubr.f32.gmra.mrb[0].mxu0 %v702
      %v1712 = vpop.f32.mrb[0].mxu0
      %v1713 = vadd.f32 0.0, %v1712
      %v1714 = vpop.f32.mrb[0].mxu0
      %1715 = vmatprep.mubr.f32.mxu0 0.0
      %1716 = vmatmul.mubr.f32.gmra.mrb[0].mxu0 %v704
      %v1717 = vpop.f32.mrb[0].mxu0
      %v1718 = vadd.f32 0.0, %v1717
      %v1719 = vpop.f32.mrb[0].mxu0
      %1720 = vmatprep.mubr.f32.mxu0 0.0
      %1721 = vmatmul.mubr.f32.gmra.mrb[0].mxu0 %v706
      %v1722 = vpop.f32.mrb[0].mxu0
      %v1723 = vadd.f32 0.0, %v1722
      %v1724 = vpop.f32.mrb[0].mxu0
      %1725 = vmatprep.mubr.f32.mxu0 0.0
      %1726 = vmatmul.mubr.f32.gmra.mrb[0].mxu0 %v708
      %v1727 = vpop.f32.mrb[0].mxu0
      %v1728 = vadd.f32 0.0, %v1727
      %v1729 = vpop.f32.mrb[0].mxu0
      %1730 = vmatprep.mubr.f32.mxu0 0.0
      %1731 = vmatmul.mubr.f32.gmra.mrb[0].mxu0 %v710
      %v1732 = vpop.f32.mrb[0].mxu0
      %v1733 = vadd.f32 0.0, %v1732
      %v1734 = vpop.f32.mrb[0].mxu0
      %1735 = vmatprep.mubr.f32.mxu0 0.0
      %1736 = vmatmul.mubr.f32.gmra.mrb[0].mxu0 %v1631
      %v1737 = vpop.f32.mrb[0].mxu0
      %v1738 = vadd.f32 0.0, %v1737
      %v1739 = vpop.f32.mrb[0].mxu0
      %1740 = vdwg.mxu0
      %v1741 = vld [vmem:[#allocation2] sm:$0xff]
      %v1742 = vld [vmem:[#allocation2 + $0x8] sm:$0xff]
      %v1743 = vld [vmem:[#allocation2 + $0x10] sm:$0xff]
      %v1744 = vld [vmem:[#allocation2 + $0x18] sm:$0xff]
      %v1745 = vld [vmem:[#allocation2 + $0x20] sm:$0xff]
      %v1746 = vld [vmem:[#allocation2 + $0x28] sm:$0xff]
      %v1747 = vld [vmem:[#allocation2 + $0x30] sm:$0xff]
      %v1748 = vld [vmem:[#allocation2 + $0x38] sm:$0xff]
      %v1749 = vadd.f32 %v1741, %v1703
      %v1750 = vadd.f32 %v1742, %v1708
      %v1751 = vadd.f32 %v1743, %v1713
      %v1752 = vadd.f32 %v1744, %v1718
      %v1753 = vadd.f32 %v1745, %v1723
      %v1754 = vadd.f32 %v1746, %v1728
      %v1755 = vadd.f32 %v1747, %v1733
      %v1756 = vadd.f32 %v1748, %v1738
      %1757 = vst.msk [vmem:[#allocation2] sm:$0xff] %vm353, %v1749
      %1758 = vst.msk [vmem:[#allocation2 + $0x8] sm:$0xff] %vm353, %v1750
      %1759 = vst.msk [vmem:[#allocation2 + $0x10] sm:$0xff] %vm353, %v1751
      %1760 = vst.msk [vmem:[#allocation2 + $0x18] sm:$0xff] %vm353, %v1752
      %1761 = vst.msk [vmem:[#allocation2 + $0x20] sm:$0xff] %vm353, %v1753
      %1762 = vst.msk [vmem:[#allocation2 + $0x28] sm:$0xff] %vm353, %v1754
      %1763 = vst.msk [vmem:[#allocation2 + $0x30] sm:$0xff] %vm353, %v1755
      %1764 = vst.msk [vmem:[#allocation2 + $0x38] sm:$0xff] %vm353, %v1756
      %v1765 = vld [vmem:[#allocation2] sm:$0xff]
      %v1766 = vld [vmem:[#allocation2 + $0x8] sm:$0xff]
      %v1767 = vld [vmem:[#allocation2 + $0x10] sm:$0xff]
      %v1768 = vld [vmem:[#allocation2 + $0x18] sm:$0xff]
      %v1769 = vld [vmem:[#allocation2 + $0x20] sm:$0xff]
      %v1770 = vld [vmem:[#allocation2 + $0x28] sm:$0xff]
      %v1771 = vld [vmem:[#allocation2 + $0x30] sm:$0xff]
      %v1772 = vld [vmem:[#allocation2 + $0x38] sm:$0xff]
      %v1773 = vld [vmem:[%s3] sm:$0x1]
      %v1775 = vlaneseq
      %v1776 = vshrl.u32 %v1775, 7
      %v1777 = vsub.s32 0, %v1776
      %v1778 = vrot.slane %v1773, %v1777
      %v1780 = vadd.f32 %v1765, %v1778
      %v1781 = vadd.f32 %v1766, %v1778
      %v1782 = vadd.f32 %v1767, %v1778
      %v1783 = vadd.f32 %v1768, %v1778
      %v1784 = vadd.f32 %v1769, %v1778
      %v1785 = vadd.f32 %v1770, %v1778
      %v1786 = vadd.f32 %v1771, %v1778
      %v1787 = vadd.f32 %v1772, %v1778
      %1788 = vst.msk [vmem:[%s316] sm:$0xff] %vm353, %v1780
      %1789 = vst.msk [vmem:[%s316 + $0x8] sm:$0xff] %vm353, %v1781
      %1790 = vst.msk [vmem:[%s316 + $0x10] sm:$0xff] %vm353, %v1782
      %1791 = vst.msk [vmem:[%s316 + $0x18] sm:$0xff] %vm353, %v1783
      %1792 = vst.msk [vmem:[%s316 + $0x20] sm:$0xff] %vm353, %v1784
      %1793 = vst.msk [vmem:[%s316 + $0x28] sm:$0xff] %vm353, %v1785
      %1794 = vst.msk [vmem:[%s316 + $0x30] sm:$0xff] %vm353, %v1786
      %1795 = vst.msk [vmem:[%s316 + $0x38] sm:$0xff] %vm353, %v1787
      %s1796 = smul.u32 8, %s20
      %p1797 = scmp.lt.s32.totalorder %s19, 1
      %s1798 = scalar_select %p1797, %s19, 1
      %p1799 = scmp.lt.s32.totalorder %s1796, 7
      %s1800 = scalar_select %p1799, %s1796, 7
      %s1801 = smul.addr %s1798, 8
      %s1802 = sadd.s32 %s1800, %s1801
      %s1803 = smul.addr %s1802, 8
      %s1804 = scalar_lea.vmem %s4, %s1803
      // Predicated region
      $region37: #{tpu_custom_call.1} parent=35 // pred_check
        %p1805 = pneg %p149
      $region38: #{tpu_custom_call.1} parent=35 // pred_check_branch
        %1807 = sbr.rel (%p1805) target = $region40
      $region39: #{tpu_custom_call.1} parent=35 // pred_region
        %s1808 = smul.u32 8, %s20
      $region40: #{tpu_custom_call.1} parent=35 // pred_fallthru
        _
    $region36: #{tpu_custom_call.1} parent=5 // pred_fallthru
      _
    %p1809 = scmp.le.s32.totalorder 2, %s10
    // Predicated region
    $region41: #{tpu_custom_call.1} parent=5 // pred_check
      %p1810 = pneg %p1809
    $region42: #{tpu_custom_call.1} parent=5 // pred_check_branch
      %1812 = sbr.rel (%p1810) target = $region44
    $region43: #{tpu_custom_call.1} parent=5 // pred_region
      %s1813 = ssub.s32 %s10, 2
      // Predicated region
      $region45: #{tpu_custom_call.1} parent=43 // pred_check
        %p1814 = pneg %p155
      $region46: #{tpu_custom_call.1} parent=43 // pred_check_branch
        %1816 = sbr.rel (%p1814) target = $region48
      $region47: #{tpu_custom_call.1} parent=43 // pred_region
        %s1817 = smul.u32 8, %s22
        %p1818 = scmp.lt.s32.totalorder %s21, 1
        %s1819 = scalar_select %p1818, %s21, 1
        %p1820 = scmp.lt.s32.totalorder %s1817, 7
        %s1821 = scalar_select %p1820, %s1817, 7
        %s1822 = smul.addr %s1819, 8
        %s1823 = sadd.s32 %s1821, %s1822
        %s1824 = smul.addr %s1823, 8
        %s1825 = scalar_lea.vmem %s4, %s1824
      $region48: #{tpu_custom_call.1} parent=43 // pred_fallthru
        _
    $region44: #{tpu_custom_call.1} parent=5 // pred_fallthru
      _
  $region6: #{tpu_custom_call.1} parent=0 // loop_footer
    %s14 = sadd.s32 1, %s10
  $region7: #{tpu_custom_call.1} parent=0 // loop_footer_branch
    %9 = sbr.rel target = $region3
  $region8: #{tpu_custom_call.1} parent=0 // loop_exit
    _

</llo_original>
